<compile_context>
chip_gen: v7x
topology: tpu7x:2x2x1
jax: 0.10.0
libtpu: 0.0.40
codegen_flags: <defaults>
</compile_context>

<pallas_src>
import numpy as np
import jax
import jax.numpy as jnp
from jax import lax
from jax.experimental import pallas as pl
from jax.experimental.pallas import tpu as pltpu


# ----------------------------------------------------------------------------
# Pallas kernel: whole sequence in one invocation.
# ----------------------------------------------------------------------------
def make_encoder_kernel(T, Bp, H, L):
    """T, Bp (padded batch), H, L are static Python ints captured by closure."""

    def kernel(x_ref, h0_ref, eps_ref,
               w_emb_ref, b_emb_ref,
               w_i_ref, w_h_ref, b_i_ref, b_hn_ref,
               w_head_ref, b_head_ref,
               out_h_ref, samp_ref, mean_ref, lv_ref):
        f32 = jnp.float32

        # ---- Batched prologue (independent of the recurrent state) ----------
        # Block-diagonal embed of [a|s|r] + ReLU for all T*Bp rows at once,
        # then the fused input-to-hidden gate matmul for all timesteps.
        emb = jnp.maximum(
            jnp.dot(x_ref[...], w_emb_ref[...], preferred_element_type=f32)
            + b_emb_ref[...], 0.0)                                   # (TB, Din)
        xg_all = (jnp.dot(emb, w_i_ref[...], preferred_element_type=f32)
                  + b_i_ref[...])                                    # (TB, 3H)

        w_h = w_h_ref[...]            # (H, 3H)  fused [W_hr|W_hz|W_hn]
        b_hn = b_hn_ref[...]          # (1, H)

        # ---- Serial GRU recurrence (fully unrolled; only one (H,3H) matmul
        #      + gate nonlinearities per step on the critical path) ----------
        h = h0_ref[...]               # (Bp, H)
        for t in range(T):            # T static -> unrolled, static slices
            lo = t * Bp               # Bp is a multiple of 8 -> aligned
            xg = xg_all[lo:lo + Bp, :]                               # (Bp, 3H)
            hg = jnp.dot(h, w_h, preferred_element_type=f32)         # (Bp, 3H)
            r = jax.nn.sigmoid(xg[:, 0:H] + hg[:, 0:H])
            z = jax.nn.sigmoid(xg[:, H:2 * H] + hg[:, H:2 * H])
            n = jnp.tanh(xg[:, 2 * H:3 * H]
                         + r * (hg[:, 2 * H:3 * H] + b_hn))
            h = (1.0 - z) * n + z * h
            out_h_ref[lo:lo + Bp, :] = h

        # ---- Batched epilogue: fused mu|logvar heads + reparameterisation ---
        h_all = out_h_ref[...]                                       # (TB, H)
        heads = (jnp.dot(h_all, w_head_ref[...], preferred_element_type=f32)
                 + b_head_ref[...])                                  # (TB, 2L)
        mu = heads[:, :L]
        lv = heads[:, L:]
        mean_ref[...] = mu
        lv_ref[...] = lv
        samp_ref[...] = mu + eps_ref[...] * jnp.exp(0.5 * lv)

    return kernel


# ----------------------------------------------------------------------------
# Wrapper: fuse weights, pad batch, call the kernel once, un-pad outputs.
# ----------------------------------------------------------------------------
def rnn_encoder_forward(actions, states, rewards, hidden_state, eps, params):
    T, B, A = actions.shape
    S = states.shape[-1]
    R = rewards.shape[-1]
    H = params["w_hr"].shape[0]
    L = params["w_mu"].shape[1]

    # ---- Fuse weights (one-time, wrapper-side XLA ops) ----------------------
    E_a = params["wa"].shape[1]
    E_s = params["ws"].shape[1]
    E_r = params["wr"].shape[1]
    D_in = A + S + R
    Din = E_a + E_s + E_r

    # Block-diagonal embedding weight: [a|s|r] @ W_emb == [a@Wa | s@Ws | r@Wr]
    # (exactly equivalent because off-diagonal blocks are zero and ReLU is
    #  elementwise).
    w_emb = jnp.zeros((D_in, Din), jnp.float32)
    w_emb = w_emb.at[:A, :E_a].set(params["wa"])
    w_emb = w_emb.at[A:A + S, E_a:E_a + E_s].set(params["ws"])
    w_emb = w_emb.at[A + S:, E_a + E_s:].set(params["wr"])
    b_emb = jnp.concatenate([params["ba"], params["bs"], params["br"]], axis=1)

    w_i = jnp.concatenate([params["w_ir"], params["w_iz"], params["w_in"]],
                          axis=1)                                    # (Din, 3H)
    w_h = jnp.concatenate([params["w_hr"], params["w_hz"], params["w_hn"]],
                          axis=1)                                    # (H, 3H)
    b_i = jnp.concatenate([params["b_r"], params["b_z"], params["b_in"]],
                          axis=1)                                    # (1, 3H)
    b_hn = params["b_hn"]                                            # (1, H)

    w_head = jnp.concatenate([params["w_mu"], params["w_lv"]], axis=1)  # (H,2L)
    b_head = jnp.concatenate([params["b_mu"], params["b_lv"]], axis=1)  # (1,2L)

    # ---- Pad batch to the f32 sublane multiple (8) and flatten time*batch ---
    Bp = ((B + 7) // 8) * 8
    pad = Bp - B

    x_in = jnp.concatenate([actions, states, rewards], axis=-1)      # (T,B,Din_in)
    h0 = hidden_state[0]                                             # (B, H)
    eps_p = eps
    if pad:
        x_in = jnp.pad(x_in, ((0, 0), (0, pad), (0, 0)))
        eps_p = jnp.pad(eps_p, ((0, 0), (0, pad), (0, 0)))
        h0 = jnp.pad(h0, ((0, pad), (0, 0)))
    TB = T * Bp
    x_in = x_in.reshape(TB, D_in)
    eps_p = eps_p.reshape(TB, L)

    kernel = make_encoder_kernel(T, Bp, H, L)

    operands = [x_in, h0, eps_p,
                w_emb, b_emb,
                w_i, w_h, b_i, b_hn,
                w_head, b_head]

    def full_spec(arr):
        nd = arr.ndim
        return pl.BlockSpec(arr.shape, lambda i, _nd=nd: (0,) * _nd)

    in_specs = [full_spec(a) for a in operands]
    out_shape = (
        jax.ShapeDtypeStruct((TB, H), jnp.float32),   # GRU outputs (flat)
        jax.ShapeDtypeStruct((TB, L), jnp.float32),   # latent_sample (flat)
        jax.ShapeDtypeStruct((TB, L), jnp.float32),   # latent_mean (flat)
        jax.ShapeDtypeStruct((TB, L), jnp.float32),   # latent_logvar (flat)
    )
    out_specs = [
        pl.BlockSpec((TB, H), lambda i: (0, 0)),
        pl.BlockSpec((TB, L), lambda i: (0, 0)),
        pl.BlockSpec((TB, L), lambda i: (0, 0)),
        pl.BlockSpec((TB, L), lambda i: (0, 0)),
    ]

    h_flat, samp_flat, mean_flat, lv_flat = pl.pallas_call(
        kernel,
        out_shape=out_shape,
        grid_spec=pltpu.PrefetchScalarGridSpec(
            num_scalar_prefetch=0,
            grid=(1,),                       # single invocation: no per-step
            in_specs=in_specs,               # grid overhead, everything VMEM-
            out_specs=out_specs,             # resident (~100 KB total).
        ),
        compiler_params=pltpu.CompilerParams(
            dimension_semantics=("arbitrary",)),
    )(*operands)

    def unflat(a, F):
        return a.reshape(T, Bp, F)[:, :B]

    output = unflat(h_flat, H)
    latent_sample = unflat(samp_flat, L)
    latent_mean = unflat(mean_flat, L)
    latent_logvar = unflat(lv_flat, L)
    return latent_sample, latent_mean, latent_logvar, output


# ----------------------------------------------------------------------------
# Pure-JAX reference (same math) for correctness check
# ----------------------------------------------------------------------------
def ref_forward(actions, states, rewards, hidden_state, eps, p):
    ha = jax.nn.relu(actions @ p["wa"] + p["ba"])
    hs = jax.nn.relu(states @ p["ws"] + p["bs"])
    hr = jax.nn.relu(rewards @ p["wr"] + p["br"])
    x = jnp.concatenate([ha, hs, hr], axis=2)

    def step(h, x_t):
        r = jax.nn.sigmoid(x_t @ p["w_ir"] + h @ p["w_hr"] + p["b_r"])
        z = jax.nn.sigmoid(x_t @ p["w_iz"] + h @ p["w_hz"] + p["b_z"])
        n = jnp.tanh(x_t @ p["w_in"] + p["b_in"] + r * (h @ p["w_hn"] + p["b_hn"]))
        h_new = (1.0 - z) * n + z * h
        return h_new, h_new

    _, outs = lax.scan(step, hidden_state[0], x)
    mu = outs @ p["w_mu"] + p["b_mu"]
    lv = outs @ p["w_lv"] + p["b_lv"]
    samp = mu + eps * jnp.exp(0.5 * lv)
    return samp, mu, lv, outs


# ----------------------------------------------------------------------------
# Deterministic parameter initialization (matches __init__ shapes)
# ----------------------------------------------------------------------------
def orthogonal(key, shape):
    a = jax.random.normal(key, shape, dtype=jnp.float32)
    tall = shape[0] >= shape[1]
    q, r = jnp.linalg.qr(a if tall else a.T)
    q = q * jnp.sign(jnp.diag(r))
    return q if tall else q.T


def linear_init(key, fan_in, fan_out):
    kw, kb = jax.random.split(key)
    bound = 1.0 / np.sqrt(fan_in)
    w = jax.random.uniform(kw, (fan_in, fan_out), minval=-bound, maxval=bound,
                           dtype=jnp.float32)
    b = jax.random.uniform(kb, (1, fan_out), minval=-bound, maxval=bound,
                           dtype=jnp.float32)
    return w, b


def make_params(key, action_dim=2, action_embed=10, state_dim=2, state_embed=10,
                reward_size=1, reward_embed=5, hidden=64, latent=32):
    keys = jax.random.split(key, 8)
    p = {}
    p["wa"], p["ba"] = linear_init(keys[0], action_dim, action_embed)
    p["ws"], p["bs"] = linear_init(keys[1], state_dim, state_embed)
    p["wr"], p["br"] = linear_init(keys[2], reward_size, reward_embed)

    din = action_embed + state_embed + reward_embed  # 25
    # GRU weights: orthogonal init (as in __init__), biases zero.
    w_ih = orthogonal(keys[3], (3 * hidden, din))    # (3H, Din), PyTorch layout
    w_hh = orthogonal(keys[4], (3 * hidden, hidden))
    p["w_ir"] = w_ih[0 * hidden:1 * hidden].T        # (Din, H)
    p["w_iz"] = w_ih[1 * hidden:2 * hidden].T
    p["w_in"] = w_ih[2 * hidden:3 * hidden].T
    p["w_hr"] = w_hh[0 * hidden:1 * hidden].T        # (H, H)
    p["w_hz"] = w_hh[1 * hidden:2 * hidden].T
    p["w_hn"] = w_hh[2 * hidden:3 * hidden].T
    zeros_h = jnp.zeros((1, hidden), jnp.float32)
    p["b_r"], p["b_z"], p["b_in"], p["b_hn"] = zeros_h, zeros_h, zeros_h, zeros_h

    p["w_mu"], p["b_mu"] = linear_init(keys[5], hidden, latent)
    p["w_lv"], p["b_lv"] = linear_init(keys[6], hidden, latent)
    return p


if __name__ == "__main__":
    key = jax.random.PRNGKey(0)
    T, B = 8, 4
    action_dim, state_dim, reward_size = 2, 2, 1
    hidden, latent = 64, 32

    k_p, k_a, k_s, k_r, k_h, k_e = jax.random.split(key, 6)
    params = make_params(k_p, hidden=hidden, latent=latent)

    actions = jax.random.normal(k_a, (T, B, action_dim), dtype=jnp.float32)
    states = jax.random.normal(k_s, (T, B, state_dim), dtype=jnp.float32)
    rewards = jax.random.normal(k_r, (T, B, reward_size), dtype=jnp.float32)
    hidden_state = jax.random.normal(k_h, (1, B, hidden), dtype=jnp.float32)
    # eps for the reparameterisation trick (torch.randn_like equivalent)
    eps = jax.random.normal(k_e, (T, B, latent), dtype=jnp.float32)

    outs = rnn_encoder_forward(actions, states, rewards, hidden_state, eps, params)
    outs = jax.block_until_ready(outs)

    refs = ref_forward(actions, states, rewards, hidden_state, eps, params)
    for o, r in zip(outs, refs):
        np.testing.assert_allclose(np.asarray(o), np.asarray(r),
                                   rtol=2e-3, atol=2e-3)

    print("KERNEL_OK")
</pallas_src>

<mosaic_0001>
module attributes {stable_mosaic.version = 11 : i64} {
  func.func @kernel(%arg0: i32, %arg1: memref<64x5xf32, #tpu.memory_space<vmem>>, %arg2: memref<8x64xf32, #tpu.memory_space<vmem>>, %arg3: memref<64x32xf32, #tpu.memory_space<vmem>>, %arg4: memref<5x25xf32, #tpu.memory_space<vmem>>, %arg5: memref<1x25xf32, #tpu.memory_space<vmem>>, %arg6: memref<25x192xf32, #tpu.memory_space<vmem>>, %arg7: memref<64x192xf32, #tpu.memory_space<vmem>>, %arg8: memref<1x192xf32, #tpu.memory_space<vmem>>, %arg9: memref<1x64xf32, #tpu.memory_space<vmem>>, %arg10: memref<64x64xf32, #tpu.memory_space<vmem>>, %arg11: memref<1x64xf32, #tpu.memory_space<vmem>>, %arg12: memref<64x64xf32, #tpu.memory_space<vmem>>, %arg13: memref<64x32xf32, #tpu.memory_space<vmem>>, %arg14: memref<64x32xf32, #tpu.memory_space<vmem>>, %arg15: memref<64x32xf32, #tpu.memory_space<vmem>>) attributes {dimension_semantics = [#tpu.dimension_semantics<arbitrary>], iteration_bounds = array<i64: 1>, scalar_prefetch = 0 : i64, scratch_operands = 0 : i64, tpu.core_type = #tpu.core_type<tc>, window_params = [{pipeline_mode = #tpu.pipeline_mode<synchronous>, transform_indices = @transform_0, window_bounds = array<i64: 64, 5>}, {pipeline_mode = #tpu.pipeline_mode<synchronous>, transform_indices = @transform_1, window_bounds = array<i64: 8, 64>}, {pipeline_mode = #tpu.pipeline_mode<synchronous>, transform_indices = @transform_2, window_bounds = array<i64: 64, 32>}, {pipeline_mode = #tpu.pipeline_mode<synchronous>, transform_indices = @transform_3, window_bounds = array<i64: 5, 25>}, {pipeline_mode = #tpu.pipeline_mode<synchronous>, transform_indices = @transform_4, window_bounds = array<i64: 1, 25>}, {pipeline_mode = #tpu.pipeline_mode<synchronous>, transform_indices = @transform_5, window_bounds = array<i64: 25, 192>}, {pipeline_mode = #tpu.pipeline_mode<synchronous>, transform_indices = @transform_6, window_bounds = array<i64: 64, 192>}, {pipeline_mode = #tpu.pipeline_mode<synchronous>, transform_indices = @transform_7, window_bounds = array<i64: 1, 192>}, {pipeline_mode = #tpu.pipeline_mode<synchronous>, transform_indices = @transform_8, window_bounds = array<i64: 1, 64>}, {pipeline_mode = #tpu.pipeline_mode<synchronous>, transform_indices = @transform_9, window_bounds = array<i64: 64, 64>}, {pipeline_mode = #tpu.pipeline_mode<synchronous>, transform_indices = @transform_10, window_bounds = array<i64: 1, 64>}, {pipeline_mode = #tpu.pipeline_mode<synchronous>, transform_indices = @transform_11, window_bounds = array<i64: 64, 64>}, {pipeline_mode = #tpu.pipeline_mode<synchronous>, transform_indices = @transform_12, window_bounds = array<i64: 64, 32>}, {pipeline_mode = #tpu.pipeline_mode<synchronous>, transform_indices = @transform_13, window_bounds = array<i64: 64, 32>}, {pipeline_mode = #tpu.pipeline_mode<synchronous>, transform_indices = @transform_14, window_bounds = array<i64: 64, 32>}]} {
    %c0 = arith.constant 0 : index
    %c0_0 = arith.constant 0 : index
    %0 = vector.load %arg1[%c0, %c0_0] : memref<64x5xf32, #tpu.memory_space<vmem>>, vector<64x5xf32>
    %c0_1 = arith.constant 0 : index
    %c0_2 = arith.constant 0 : index
    %1 = vector.load %arg4[%c0_1, %c0_2] : memref<5x25xf32, #tpu.memory_space<vmem>>, vector<5x25xf32>
    %cst = arith.constant dense<0.000000e+00> : vector<64x25xf32>
    %2 = tpu.matmul %0, %1, %cst {dimension_numbers = #tpu.dot_dimension_numbers<[1], [0], [0], [1], [0, 0, 1, 1], [], []>} : vector<64x5xf32>, vector<5x25xf32>, vector<64x25xf32> -> vector<64x25xf32>
    %c0_3 = arith.constant 0 : index
    %c0_4 = arith.constant 0 : index
    %3 = vector.load %arg5[%c0_3, %c0_4] : memref<1x25xf32, #tpu.memory_space<vmem>>, vector<1x25xf32>
    %4 = vector.broadcast %3 : vector<1x25xf32> to vector<64x25xf32>
    %5 = arith.addf %2, %4 : vector<64x25xf32>
    %cst_5 = arith.constant 0.000000e+00 : f32
    %6 = vector.broadcast %cst_5 : f32 to vector<64x25xf32>
    %7 = arith.maximumf %5, %6 : vector<64x25xf32>
    %c0_6 = arith.constant 0 : index
    %c0_7 = arith.constant 0 : index
    %8 = vector.load %arg6[%c0_6, %c0_7] : memref<25x192xf32, #tpu.memory_space<vmem>>, vector<25x192xf32>
    %cst_8 = arith.constant dense<0.000000e+00> : vector<64x192xf32>
    %9 = tpu.matmul %7, %8, %cst_8 {dimension_numbers = #tpu.dot_dimension_numbers<[1], [0], [0], [1], [0, 0, 1, 1], [], []>} : vector<64x25xf32>, vector<25x192xf32>, vector<64x192xf32> -> vector<64x192xf32>
    %c0_9 = arith.constant 0 : index
    %c0_10 = arith.constant 0 : index
    %10 = vector.load %arg8[%c0_9, %c0_10] : memref<1x192xf32, #tpu.memory_space<vmem>>, vector<1x192xf32>
    %11 = vector.broadcast %10 : vector<1x192xf32> to vector<64x192xf32>
    %12 = arith.addf %9, %11 : vector<64x192xf32>
    %c0_11 = arith.constant 0 : index
    %c0_12 = arith.constant 0 : index
    %13 = vector.load %arg7[%c0_11, %c0_12] : memref<64x192xf32, #tpu.memory_space<vmem>>, vector<64x192xf32>
    %c0_13 = arith.constant 0 : index
    %c0_14 = arith.constant 0 : index
    %14 = vector.load %arg9[%c0_13, %c0_14] : memref<1x64xf32, #tpu.memory_space<vmem>>, vector<1x64xf32>
    %c0_15 = arith.constant 0 : index
    %c0_16 = arith.constant 0 : index
    %15 = vector.load %arg2[%c0_15, %c0_16] : memref<8x64xf32, #tpu.memory_space<vmem>>, vector<8x64xf32>
    %16 = vector.extract_strided_slice %12 {offsets = [0, 0], sizes = [8, 192], strides = [1, 1]} : vector<64x192xf32> to vector<8x192xf32>
    %cst_17 = arith.constant dense<0.000000e+00> : vector<8x192xf32>
    %17 = tpu.matmul %15, %13, %cst_17 {dimension_numbers = #tpu.dot_dimension_numbers<[1], [0], [0], [1], [0, 0, 1, 1], [], []>} : vector<8x64xf32>, vector<64x192xf32>, vector<8x192xf32> -> vector<8x192xf32>
    %18 = vector.extract_strided_slice %16 {offsets = [0, 0], sizes = [8, 64], strides = [1, 1]} : vector<8x192xf32> to vector<8x64xf32>
    %19 = vector.extract_strided_slice %17 {offsets = [0, 0], sizes = [8, 64], strides = [1, 1]} : vector<8x192xf32> to vector<8x64xf32>
    %20 = arith.addf %18, %19 : vector<8x64xf32>
    %21 = arith.negf %20 : vector<8x64xf32>
    %22 = math.exp %21 : vector<8x64xf32>
    %cst_18 = arith.constant 1.000000e+00 : f32
    %23 = vector.broadcast %cst_18 : f32 to vector<8x64xf32>
    %24 = arith.addf %23, %22 : vector<8x64xf32>
    %25 = arith.divf %23, %24 : vector<8x64xf32>
    %26 = vector.extract_strided_slice %16 {offsets = [0, 64], sizes = [8, 64], strides = [1, 1]} : vector<8x192xf32> to vector<8x64xf32>
    %27 = vector.extract_strided_slice %17 {offsets = [0, 64], sizes = [8, 64], strides = [1, 1]} : vector<8x192xf32> to vector<8x64xf32>
    %28 = arith.addf %26, %27 : vector<8x64xf32>
    %29 = arith.negf %28 : vector<8x64xf32>
    %30 = math.exp %29 : vector<8x64xf32>
    %cst_19 = arith.constant 1.000000e+00 : f32
    %31 = vector.broadcast %cst_19 : f32 to vector<8x64xf32>
    %32 = arith.addf %31, %30 : vector<8x64xf32>
    %33 = arith.divf %31, %32 : vector<8x64xf32>
    %34 = vector.extract_strided_slice %16 {offsets = [0, 128], sizes = [8, 64], strides = [1, 1]} : vector<8x192xf32> to vector<8x64xf32>
    %35 = vector.extract_strided_slice %17 {offsets = [0, 128], sizes = [8, 64], strides = [1, 1]} : vector<8x192xf32> to vector<8x64xf32>
    %36 = vector.broadcast %14 : vector<1x64xf32> to vector<8x64xf32>
    %37 = arith.addf %35, %36 : vector<8x64xf32>
    %38 = arith.mulf %25, %37 : vector<8x64xf32>
    %39 = arith.addf %34, %38 : vector<8x64xf32>
    %40 = math.tanh %39 : vector<8x64xf32>
    %cst_20 = arith.constant 1.000000e+00 : f32
    %41 = vector.broadcast %cst_20 : f32 to vector<8x64xf32>
    %42 = arith.subf %41, %33 : vector<8x64xf32>
    %43 = arith.mulf %42, %40 : vector<8x64xf32>
    %44 = arith.mulf %33, %15 : vector<8x64xf32>
    %45 = arith.addf %43, %44 : vector<8x64xf32>
    %c0_21 = arith.constant 0 : index
    %c0_22 = arith.constant 0 : index
    %46 = vector.load %arg12[%c0_21, %c0_22] : memref<64x64xf32, #tpu.memory_space<vmem>>, vector<8x64xf32>
    tpu.vector_store %arg12[%c0_21, %c0_22], %45 {strides = array<i32>} : memref<64x64xf32, #tpu.memory_space<vmem>>, vector<8x64xf32>,
    %47 = vector.extract_strided_slice %12 {offsets = [8, 0], sizes = [8, 192], strides = [1, 1]} : vector<64x192xf32> to vector<8x192xf32>
    %cst_23 = arith.constant dense<0.000000e+00> : vector<8x192xf32>
    %48 = tpu.matmul %45, %13, %cst_23 {dimension_numbers = #tpu.dot_dimension_numbers<[1], [0], [0], [1], [0, 0, 1, 1], [], []>} : vector<8x64xf32>, vector<64x192xf32>, vector<8x192xf32> -> vector<8x192xf32>
    %49 = vector.extract_strided_slice %47 {offsets = [0, 0], sizes = [8, 64], strides = [1, 1]} : vector<8x192xf32> to vector<8x64xf32>
    %50 = vector.extract_strided_slice %48 {offsets = [0, 0], sizes = [8, 64], strides = [1, 1]} : vector<8x192xf32> to vector<8x64xf32>
    %51 = arith.addf %49, %50 : vector<8x64xf32>
    %52 = arith.negf %51 : vector<8x64xf32>
    %53 = math.exp %52 : vector<8x64xf32>
    %cst_24 = arith.constant 1.000000e+00 : f32
    %54 = vector.broadcast %cst_24 : f32 to vector<8x64xf32>
    %55 = arith.addf %54, %53 : vector<8x64xf32>
    %56 = arith.divf %54, %55 : vector<8x64xf32>
    %57 = vector.extract_strided_slice %47 {offsets = [0, 64], sizes = [8, 64], strides = [1, 1]} : vector<8x192xf32> to vector<8x64xf32>
    %58 = vector.extract_strided_slice %48 {offsets = [0, 64], sizes = [8, 64], strides = [1, 1]} : vector<8x192xf32> to vector<8x64xf32>
    %59 = arith.addf %57, %58 : vector<8x64xf32>
    %60 = arith.negf %59 : vector<8x64xf32>
    %61 = math.exp %60 : vector<8x64xf32>
    %cst_25 = arith.constant 1.000000e+00 : f32
    %62 = vector.broadcast %cst_25 : f32 to vector<8x64xf32>
    %63 = arith.addf %62, %61 : vector<8x64xf32>
    %64 = arith.divf %62, %63 : vector<8x64xf32>
    %65 = vector.extract_strided_slice %47 {offsets = [0, 128], sizes = [8, 64], strides = [1, 1]} : vector<8x192xf32> to vector<8x64xf32>
    %66 = vector.extract_strided_slice %48 {offsets = [0, 128], sizes = [8, 64], strides = [1, 1]} : vector<8x192xf32> to vector<8x64xf32>
    %67 = vector.broadcast %14 : vector<1x64xf32> to vector<8x64xf32>
    %68 = arith.addf %66, %67 : vector<8x64xf32>
    %69 = arith.mulf %56, %68 : vector<8x64xf32>
    %70 = arith.addf %65, %69 : vector<8x64xf32>
    %71 = math.tanh %70 : vector<8x64xf32>
    %cst_26 = arith.constant 1.000000e+00 : f32
    %72 = vector.broadcast %cst_26 : f32 to vector<8x64xf32>
    %73 = arith.subf %72, %64 : vector<8x64xf32>
    %74 = arith.mulf %73, %71 : vector<8x64xf32>
    %75 = arith.mulf %64, %45 : vector<8x64xf32>
    %76 = arith.addf %74, %75 : vector<8x64xf32>
    %c8 = arith.constant 8 : index
    %c0_27 = arith.constant 0 : index
    %77 = vector.load %arg12[%c8, %c0_27] : memref<64x64xf32, #tpu.memory_space<vmem>>, vector<8x64xf32>
    tpu.vector_store %arg12[%c8, %c0_27], %76 {strides = array<i32>} : memref<64x64xf32, #tpu.memory_space<vmem>>, vector<8x64xf32>,
    %78 = vector.extract_strided_slice %12 {offsets = [16, 0], sizes = [8, 192], strides = [1, 1]} : vector<64x192xf32> to vector<8x192xf32>
    %cst_28 = arith.constant dense<0.000000e+00> : vector<8x192xf32>
    %79 = tpu.matmul %76, %13, %cst_28 {dimension_numbers = #tpu.dot_dimension_numbers<[1], [0], [0], [1], [0, 0, 1, 1], [], []>} : vector<8x64xf32>, vector<64x192xf32>, vector<8x192xf32> -> vector<8x192xf32>
    %80 = vector.extract_strided_slice %78 {offsets = [0, 0], sizes = [8, 64], strides = [1, 1]} : vector<8x192xf32> to vector<8x64xf32>
    %81 = vector.extract_strided_slice %79 {offsets = [0, 0], sizes = [8, 64], strides = [1, 1]} : vector<8x192xf32> to vector<8x64xf32>
    %82 = arith.addf %80, %81 : vector<8x64xf32>
    %83 = arith.negf %82 : vector<8x64xf32>
    %84 = math.exp %83 : vector<8x64xf32>
    %cst_29 = arith.constant 1.000000e+00 : f32
    %85 = vector.broadcast %cst_29 : f32 to vector<8x64xf32>
    %86 = arith.addf %85, %84 : vector<8x64xf32>
    %87 = arith.divf %85, %86 : vector<8x64xf32>
    %88 = vector.extract_strided_slice %78 {offsets = [0, 64], sizes = [8, 64], strides = [1, 1]} : vector<8x192xf32> to vector<8x64xf32>
    %89 = vector.extract_strided_slice %79 {offsets = [0, 64], sizes = [8, 64], strides = [1, 1]} : vector<8x192xf32> to vector<8x64xf32>
    %90 = arith.addf %88, %89 : vector<8x64xf32>
    %91 = arith.negf %90 : vector<8x64xf32>
    %92 = math.exp %91 : vector<8x64xf32>
    %cst_30 = arith.constant 1.000000e+00 : f32
    %93 = vector.broadcast %cst_30 : f32 to vector<8x64xf32>
    %94 = arith.addf %93, %92 : vector<8x64xf32>
    %95 = arith.divf %93, %94 : vector<8x64xf32>
    %96 = vector.extract_strided_slice %78 {offsets = [0, 128], sizes = [8, 64], strides = [1, 1]} : vector<8x192xf32> to vector<8x64xf32>
    %97 = vector.extract_strided_slice %79 {offsets = [0, 128], sizes = [8, 64], strides = [1, 1]} : vector<8x192xf32> to vector<8x64xf32>
    %98 = vector.broadcast %14 : vector<1x64xf32> to vector<8x64xf32>
    %99 = arith.addf %97, %98 : vector<8x64xf32>
    %100 = arith.mulf %87, %99 : vector<8x64xf32>
    %101 = arith.addf %96, %100 : vector<8x64xf32>
    %102 = math.tanh %101 : vector<8x64xf32>
    %cst_31 = arith.constant 1.000000e+00 : f32
    %103 = vector.broadcast %cst_31 : f32 to vector<8x64xf32>
    %104 = arith.subf %103, %95 : vector<8x64xf32>
    %105 = arith.mulf %104, %102 : vector<8x64xf32>
    %106 = arith.mulf %95, %76 : vector<8x64xf32>
    %107 = arith.addf %105, %106 : vector<8x64xf32>
    %c16 = arith.constant 16 : index
    %c0_32 = arith.constant 0 : index
    %108 = vector.load %arg12[%c16, %c0_32] : memref<64x64xf32, #tpu.memory_space<vmem>>, vector<8x64xf32>
    tpu.vector_store %arg12[%c16, %c0_32], %107 {strides = array<i32>} : memref<64x64xf32, #tpu.memory_space<vmem>>, vector<8x64xf32>,
    %109 = vector.extract_strided_slice %12 {offsets = [24, 0], sizes = [8, 192], strides = [1, 1]} : vector<64x192xf32> to vector<8x192xf32>
    %cst_33 = arith.constant dense<0.000000e+00> : vector<8x192xf32>
    %110 = tpu.matmul %107, %13, %cst_33 {dimension_numbers = #tpu.dot_dimension_numbers<[1], [0], [0], [1], [0, 0, 1, 1], [], []>} : vector<8x64xf32>, vector<64x192xf32>, vector<8x192xf32> -> vector<8x192xf32>
    %111 = vector.extract_strided_slice %109 {offsets = [0, 0], sizes = [8, 64], strides = [1, 1]} : vector<8x192xf32> to vector<8x64xf32>
    %112 = vector.extract_strided_slice %110 {offsets = [0, 0], sizes = [8, 64], strides = [1, 1]} : vector<8x192xf32> to vector<8x64xf32>
    %113 = arith.addf %111, %112 : vector<8x64xf32>
    %114 = arith.negf %113 : vector<8x64xf32>
    %115 = math.exp %114 : vector<8x64xf32>
    %cst_34 = arith.constant 1.000000e+00 : f32
    %116 = vector.broadcast %cst_34 : f32 to vector<8x64xf32>
    %117 = arith.addf %116, %115 : vector<8x64xf32>
    %118 = arith.divf %116, %117 : vector<8x64xf32>
    %119 = vector.extract_strided_slice %109 {offsets = [0, 64], sizes = [8, 64], strides = [1, 1]} : vector<8x192xf32> to vector<8x64xf32>
    %120 = vector.extract_strided_slice %110 {offsets = [0, 64], sizes = [8, 64], strides = [1, 1]} : vector<8x192xf32> to vector<8x64xf32>
    %121 = arith.addf %119, %120 : vector<8x64xf32>
    %122 = arith.negf %121 : vector<8x64xf32>
    %123 = math.exp %122 : vector<8x64xf32>
    %cst_35 = arith.constant 1.000000e+00 : f32
    %124 = vector.broadcast %cst_35 : f32 to vector<8x64xf32>
    %125 = arith.addf %124, %123 : vector<8x64xf32>
    %126 = arith.divf %124, %125 : vector<8x64xf32>
    %127 = vector.extract_strided_slice %109 {offsets = [0, 128], sizes = [8, 64], strides = [1, 1]} : vector<8x192xf32> to vector<8x64xf32>
    %128 = vector.extract_strided_slice %110 {offsets = [0, 128], sizes = [8, 64], strides = [1, 1]} : vector<8x192xf32> to vector<8x64xf32>
    %129 = vector.broadcast %14 : vector<1x64xf32> to vector<8x64xf32>
    %130 = arith.addf %128, %129 : vector<8x64xf32>
    %131 = arith.mulf %118, %130 : vector<8x64xf32>
    %132 = arith.addf %127, %131 : vector<8x64xf32>
    %133 = math.tanh %132 : vector<8x64xf32>
    %cst_36 = arith.constant 1.000000e+00 : f32
    %134 = vector.broadcast %cst_36 : f32 to vector<8x64xf32>
    %135 = arith.subf %134, %126 : vector<8x64xf32>
    %136 = arith.mulf %135, %133 : vector<8x64xf32>
    %137 = arith.mulf %126, %107 : vector<8x64xf32>
    %138 = arith.addf %136, %137 : vector<8x64xf32>
    %c24 = arith.constant 24 : index
    %c0_37 = arith.constant 0 : index
    %139 = vector.load %arg12[%c24, %c0_37] : memref<64x64xf32, #tpu.memory_space<vmem>>, vector<8x64xf32>
    tpu.vector_store %arg12[%c24, %c0_37], %138 {strides = array<i32>} : memref<64x64xf32, #tpu.memory_space<vmem>>, vector<8x64xf32>,
    %140 = vector.extract_strided_slice %12 {offsets = [32, 0], sizes = [8, 192], strides = [1, 1]} : vector<64x192xf32> to vector<8x192xf32>
    %cst_38 = arith.constant dense<0.000000e+00> : vector<8x192xf32>
    %141 = tpu.matmul %138, %13, %cst_38 {dimension_numbers = #tpu.dot_dimension_numbers<[1], [0], [0], [1], [0, 0, 1, 1], [], []>} : vector<8x64xf32>, vector<64x192xf32>, vector<8x192xf32> -> vector<8x192xf32>
    %142 = vector.extract_strided_slice %140 {offsets = [0, 0], sizes = [8, 64], strides = [1, 1]} : vector<8x192xf32> to vector<8x64xf32>
    %143 = vector.extract_strided_slice %141 {offsets = [0, 0], sizes = [8, 64], strides = [1, 1]} : vector<8x192xf32> to vector<8x64xf32>
    %144 = arith.addf %142, %143 : vector<8x64xf32>
    %145 = arith.negf %144 : vector<8x64xf32>
    %146 = math.exp %145 : vector<8x64xf32>
    %cst_39 = arith.constant 1.000000e+00 : f32
    %147 = vector.broadcast %cst_39 : f32 to vector<8x64xf32>
    %148 = arith.addf %147, %146 : vector<8x64xf32>
    %149 = arith.divf %147, %148 : vector<8x64xf32>
    %150 = vector.extract_strided_slice %140 {offsets = [0, 64], sizes = [8, 64], strides = [1, 1]} : vector<8x192xf32> to vector<8x64xf32>
    %151 = vector.extract_strided_slice %141 {offsets = [0, 64], sizes = [8, 64], strides = [1, 1]} : vector<8x192xf32> to vector<8x64xf32>
    %152 = arith.addf %150, %151 : vector<8x64xf32>
    %153 = arith.negf %152 : vector<8x64xf32>
    %154 = math.exp %153 : vector<8x64xf32>
    %cst_40 = arith.constant 1.000000e+00 : f32
    %155 = vector.broadcast %cst_40 : f32 to vector<8x64xf32>
    %156 = arith.addf %155, %154 : vector<8x64xf32>
    %157 = arith.divf %155, %156 : vector<8x64xf32>
    %158 = vector.extract_strided_slice %140 {offsets = [0, 128], sizes = [8, 64], strides = [1, 1]} : vector<8x192xf32> to vector<8x64xf32>
    %159 = vector.extract_strided_slice %141 {offsets = [0, 128], sizes = [8, 64], strides = [1, 1]} : vector<8x192xf32> to vector<8x64xf32>
    %160 = vector.broadcast %14 : vector<1x64xf32> to vector<8x64xf32>
    %161 = arith.addf %159, %160 : vector<8x64xf32>
    %162 = arith.mulf %149, %161 : vector<8x64xf32>
    %163 = arith.addf %158, %162 : vector<8x64xf32>
    %164 = math.tanh %163 : vector<8x64xf32>
    %cst_41 = arith.constant 1.000000e+00 : f32
    %165 = vector.broadcast %cst_41 : f32 to vector<8x64xf32>
    %166 = arith.subf %165, %157 : vector<8x64xf32>
    %167 = arith.mulf %166, %164 : vector<8x64xf32>
    %168 = arith.mulf %157, %138 : vector<8x64xf32>
    %169 = arith.addf %167, %168 : vector<8x64xf32>
    %c32 = arith.constant 32 : index
    %c0_42 = arith.constant 0 : index
    %170 = vector.load %arg12[%c32, %c0_42] : memref<64x64xf32, #tpu.memory_space<vmem>>, vector<8x64xf32>
    tpu.vector_store %arg12[%c32, %c0_42], %169 {strides = array<i32>} : memref<64x64xf32, #tpu.memory_space<vmem>>, vector<8x64xf32>,
    %171 = vector.extract_strided_slice %12 {offsets = [40, 0], sizes = [8, 192], strides = [1, 1]} : vector<64x192xf32> to vector<8x192xf32>
    %cst_43 = arith.constant dense<0.000000e+00> : vector<8x192xf32>
    %172 = tpu.matmul %169, %13, %cst_43 {dimension_numbers = #tpu.dot_dimension_numbers<[1], [0], [0], [1], [0, 0, 1, 1], [], []>} : vector<8x64xf32>, vector<64x192xf32>, vector<8x192xf32> -> vector<8x192xf32>
    %173 = vector.extract_strided_slice %171 {offsets = [0, 0], sizes = [8, 64], strides = [1, 1]} : vector<8x192xf32> to vector<8x64xf32>
    %174 = vector.extract_strided_slice %172 {offsets = [0, 0], sizes = [8, 64], strides = [1, 1]} : vector<8x192xf32> to vector<8x64xf32>
    %175 = arith.addf %173, %174 : vector<8x64xf32>
    %176 = arith.negf %175 : vector<8x64xf32>
    %177 = math.exp %176 : vector<8x64xf32>
    %cst_44 = arith.constant 1.000000e+00 : f32
    %178 = vector.broadcast %cst_44 : f32 to vector<8x64xf32>
    %179 = arith.addf %178, %177 : vector<8x64xf32>
    %180 = arith.divf %178, %179 : vector<8x64xf32>
    %181 = vector.extract_strided_slice %171 {offsets = [0, 64], sizes = [8, 64], strides = [1, 1]} : vector<8x192xf32> to vector<8x64xf32>
    %182 = vector.extract_strided_slice %172 {offsets = [0, 64], sizes = [8, 64], strides = [1, 1]} : vector<8x192xf32> to vector<8x64xf32>
    %183 = arith.addf %181, %182 : vector<8x64xf32>
    %184 = arith.negf %183 : vector<8x64xf32>
    %185 = math.exp %184 : vector<8x64xf32>
    %cst_45 = arith.constant 1.000000e+00 : f32
    %186 = vector.broadcast %cst_45 : f32 to vector<8x64xf32>
    %187 = arith.addf %186, %185 : vector<8x64xf32>
    %188 = arith.divf %186, %187 : vector<8x64xf32>
    %189 = vector.extract_strided_slice %171 {offsets = [0, 128], sizes = [8, 64], strides = [1, 1]} : vector<8x192xf32> to vector<8x64xf32>
    %190 = vector.extract_strided_slice %172 {offsets = [0, 128], sizes = [8, 64], strides = [1, 1]} : vector<8x192xf32> to vector<8x64xf32>
    %191 = vector.broadcast %14 : vector<1x64xf32> to vector<8x64xf32>
    %192 = arith.addf %190, %191 : vector<8x64xf32>
    %193 = arith.mulf %180, %192 : vector<8x64xf32>
    %194 = arith.addf %189, %193 : vector<8x64xf32>
    %195 = math.tanh %194 : vector<8x64xf32>
    %cst_46 = arith.constant 1.000000e+00 : f32
    %196 = vector.broadcast %cst_46 : f32 to vector<8x64xf32>
    %197 = arith.subf %196, %188 : vector<8x64xf32>
    %198 = arith.mulf %197, %195 : vector<8x64xf32>
    %199 = arith.mulf %188, %169 : vector<8x64xf32>
    %200 = arith.addf %198, %199 : vector<8x64xf32>
    %c40 = arith.constant 40 : index
    %c0_47 = arith.constant 0 : index
    %201 = vector.load %arg12[%c40, %c0_47] : memref<64x64xf32, #tpu.memory_space<vmem>>, vector<8x64xf32>
    tpu.vector_store %arg12[%c40, %c0_47], %200 {strides = array<i32>} : memref<64x64xf32, #tpu.memory_space<vmem>>, vector<8x64xf32>,
    %202 = vector.extract_strided_slice %12 {offsets = [48, 0], sizes = [8, 192], strides = [1, 1]} : vector<64x192xf32> to vector<8x192xf32>
    %cst_48 = arith.constant dense<0.000000e+00> : vector<8x192xf32>
    %203 = tpu.matmul %200, %13, %cst_48 {dimension_numbers = #tpu.dot_dimension_numbers<[1], [0], [0], [1], [0, 0, 1, 1], [], []>} : vector<8x64xf32>, vector<64x192xf32>, vector<8x192xf32> -> vector<8x192xf32>
    %204 = vector.extract_strided_slice %202 {offsets = [0, 0], sizes = [8, 64], strides = [1, 1]} : vector<8x192xf32> to vector<8x64xf32>
    %205 = vector.extract_strided_slice %203 {offsets = [0, 0], sizes = [8, 64], strides = [1, 1]} : vector<8x192xf32> to vector<8x64xf32>
    %206 = arith.addf %204, %205 : vector<8x64xf32>
    %207 = arith.negf %206 : vector<8x64xf32>
    %208 = math.exp %207 : vector<8x64xf32>
    %cst_49 = arith.constant 1.000000e+00 : f32
    %209 = vector.broadcast %cst_49 : f32 to vector<8x64xf32>
    %210 = arith.addf %209, %208 : vector<8x64xf32>
    %211 = arith.divf %209, %210 : vector<8x64xf32>
    %212 = vector.extract_strided_slice %202 {offsets = [0, 64], sizes = [8, 64], strides = [1, 1]} : vector<8x192xf32> to vector<8x64xf32>
    %213 = vector.extract_strided_slice %203 {offsets = [0, 64], sizes = [8, 64], strides = [1, 1]} : vector<8x192xf32> to vector<8x64xf32>
    %214 = arith.addf %212, %213 : vector<8x64xf32>
    %215 = arith.negf %214 : vector<8x64xf32>
    %216 = math.exp %215 : vector<8x64xf32>
    %cst_50 = arith.constant 1.000000e+00 : f32
    %217 = vector.broadcast %cst_50 : f32 to vector<8x64xf32>
    %218 = arith.addf %217, %216 : vector<8x64xf32>
    %219 = arith.divf %217, %218 : vector<8x64xf32>
    %220 = vector.extract_strided_slice %202 {offsets = [0, 128], sizes = [8, 64], strides = [1, 1]} : vector<8x192xf32> to vector<8x64xf32>
    %221 = vector.extract_strided_slice %203 {offsets = [0, 128], sizes = [8, 64], strides = [1, 1]} : vector<8x192xf32> to vector<8x64xf32>
    %222 = vector.broadcast %14 : vector<1x64xf32> to vector<8x64xf32>
    %223 = arith.addf %221, %222 : vector<8x64xf32>
    %224 = arith.mulf %211, %223 : vector<8x64xf32>
    %225 = arith.addf %220, %224 : vector<8x64xf32>
    %226 = math.tanh %225 : vector<8x64xf32>
    %cst_51 = arith.constant 1.000000e+00 : f32
    %227 = vector.broadcast %cst_51 : f32 to vector<8x64xf32>
    %228 = arith.subf %227, %219 : vector<8x64xf32>
    %229 = arith.mulf %228, %226 : vector<8x64xf32>
    %230 = arith.mulf %219, %200 : vector<8x64xf32>
    %231 = arith.addf %229, %230 : vector<8x64xf32>
    %c48 = arith.constant 48 : index
    %c0_52 = arith.constant 0 : index
    %232 = vector.load %arg12[%c48, %c0_52] : memref<64x64xf32, #tpu.memory_space<vmem>>, vector<8x64xf32>
    tpu.vector_store %arg12[%c48, %c0_52], %231 {strides = array<i32>} : memref<64x64xf32, #tpu.memory_space<vmem>>, vector<8x64xf32>,
    %233 = vector.extract_strided_slice %12 {offsets = [56, 0], sizes = [8, 192], strides = [1, 1]} : vector<64x192xf32> to vector<8x192xf32>
    %cst_53 = arith.constant dense<0.000000e+00> : vector<8x192xf32>
    %234 = tpu.matmul %231, %13, %cst_53 {dimension_numbers = #tpu.dot_dimension_numbers<[1], [0], [0], [1], [0, 0, 1, 1], [], []>} : vector<8x64xf32>, vector<64x192xf32>, vector<8x192xf32> -> vector<8x192xf32>
    %235 = vector.extract_strided_slice %233 {offsets = [0, 0], sizes = [8, 64], strides = [1, 1]} : vector<8x192xf32> to vector<8x64xf32>
    %236 = vector.extract_strided_slice %234 {offsets = [0, 0], sizes = [8, 64], strides = [1, 1]} : vector<8x192xf32> to vector<8x64xf32>
    %237 = arith.addf %235, %236 : vector<8x64xf32>
    %238 = arith.negf %237 : vector<8x64xf32>
    %239 = math.exp %238 : vector<8x64xf32>
    %cst_54 = arith.constant 1.000000e+00 : f32
    %240 = vector.broadcast %cst_54 : f32 to vector<8x64xf32>
    %241 = arith.addf %240, %239 : vector<8x64xf32>
    %242 = arith.divf %240, %241 : vector<8x64xf32>
    %243 = vector.extract_strided_slice %233 {offsets = [0, 64], sizes = [8, 64], strides = [1, 1]} : vector<8x192xf32> to vector<8x64xf32>
    %244 = vector.extract_strided_slice %234 {offsets = [0, 64], sizes = [8, 64], strides = [1, 1]} : vector<8x192xf32> to vector<8x64xf32>
    %245 = arith.addf %243, %244 : vector<8x64xf32>
    %246 = arith.negf %245 : vector<8x64xf32>
    %247 = math.exp %246 : vector<8x64xf32>
    %cst_55 = arith.constant 1.000000e+00 : f32
    %248 = vector.broadcast %cst_55 : f32 to vector<8x64xf32>
    %249 = arith.addf %248, %247 : vector<8x64xf32>
    %250 = arith.divf %248, %249 : vector<8x64xf32>
    %251 = vector.extract_strided_slice %233 {offsets = [0, 128], sizes = [8, 64], strides = [1, 1]} : vector<8x192xf32> to vector<8x64xf32>
    %252 = vector.extract_strided_slice %234 {offsets = [0, 128], sizes = [8, 64], strides = [1, 1]} : vector<8x192xf32> to vector<8x64xf32>
    %253 = vector.broadcast %14 : vector<1x64xf32> to vector<8x64xf32>
    %254 = arith.addf %252, %253 : vector<8x64xf32>
    %255 = arith.mulf %242, %254 : vector<8x64xf32>
    %256 = arith.addf %251, %255 : vector<8x64xf32>
    %257 = math.tanh %256 : vector<8x64xf32>
    %cst_56 = arith.constant 1.000000e+00 : f32
    %258 = vector.broadcast %cst_56 : f32 to vector<8x64xf32>
    %259 = arith.subf %258, %250 : vector<8x64xf32>
    %260 = arith.mulf %259, %257 : vector<8x64xf32>
    %261 = arith.mulf %250, %231 : vector<8x64xf32>
    %262 = arith.addf %260, %261 : vector<8x64xf32>
    %c56 = arith.constant 56 : index
    %c0_57 = arith.constant 0 : index
    %263 = vector.load %arg12[%c56, %c0_57] : memref<64x64xf32, #tpu.memory_space<vmem>>, vector<8x64xf32>
    tpu.vector_store %arg12[%c56, %c0_57], %262 {strides = array<i32>} : memref<64x64xf32, #tpu.memory_space<vmem>>, vector<8x64xf32>,
    %c0_58 = arith.constant 0 : index
    %c0_59 = arith.constant 0 : index
    %264 = vector.load %arg12[%c0_58, %c0_59] : memref<64x64xf32, #tpu.memory_space<vmem>>, vector<64x64xf32>
    %c0_60 = arith.constant 0 : index
    %c0_61 = arith.constant 0 : index
    %265 = vector.load %arg10[%c0_60, %c0_61] : memref<64x64xf32, #tpu.memory_space<vmem>>, vector<64x64xf32>
    %cst_62 = arith.constant dense<0.000000e+00> : vector<64x64xf32>
    %266 = tpu.matmul %264, %265, %cst_62 {dimension_numbers = #tpu.dot_dimension_numbers<[1], [0], [0], [1], [0, 0, 1, 1], [], []>} : vector<64x64xf32>, vector<64x64xf32>, vector<64x64xf32> -> vector<64x64xf32>
    %c0_63 = arith.constant 0 : index
    %c0_64 = arith.constant 0 : index
    %267 = vector.load %arg11[%c0_63, %c0_64] : memref<1x64xf32, #tpu.memory_space<vmem>>, vector<1x64xf32>
    %268 = vector.broadcast %267 : vector<1x64xf32> to vector<64x64xf32>
    %269 = arith.addf %266, %268 : vector<64x64xf32>
    %270 = vector.extract_strided_slice %269 {offsets = [0, 0], sizes = [64, 32], strides = [1, 1]} : vector<64x64xf32> to vector<64x32xf32>
    %271 = vector.extract_strided_slice %269 {offsets = [0, 32], sizes = [64, 32], strides = [1, 1]} : vector<64x64xf32> to vector<64x32xf32>
    %c0_65 = arith.constant 0 : index
    %c0_66 = arith.constant 0 : index
    %272 = vector.load %arg14[%c0_65, %c0_66] : memref<64x32xf32, #tpu.memory_space<vmem>>, vector<64x32xf32>
    tpu.vector_store %arg14[%c0_65, %c0_66], %270 {strides = array<i32>} : memref<64x32xf32, #tpu.memory_space<vmem>>, vector<64x32xf32>,
    %c0_67 = arith.constant 0 : index
    %c0_68 = arith.constant 0 : index
    %273 = vector.load %arg15[%c0_67, %c0_68] : memref<64x32xf32, #tpu.memory_space<vmem>>, vector<64x32xf32>
    tpu.vector_store %arg15[%c0_67, %c0_68], %271 {strides = array<i32>} : memref<64x32xf32, #tpu.memory_space<vmem>>, vector<64x32xf32>,
    %c0_69 = arith.constant 0 : index
    %c0_70 = arith.constant 0 : index
    %274 = vector.load %arg3[%c0_69, %c0_70] : memref<64x32xf32, #tpu.memory_space<vmem>>, vector<64x32xf32>
    %cst_71 = arith.constant 5.000000e-01 : f32
    %275 = vector.broadcast %cst_71 : f32 to vector<64x32xf32>
    %276 = arith.mulf %275, %271 : vector<64x32xf32>
    %277 = math.exp %276 : vector<64x32xf32>
    %278 = arith.mulf %274, %277 : vector<64x32xf32>
    %279 = arith.addf %270, %278 : vector<64x32xf32>
    %c0_72 = arith.constant 0 : index
    %c0_73 = arith.constant 0 : index
    %280 = vector.load %arg13[%c0_72, %c0_73] : memref<64x32xf32, #tpu.memory_space<vmem>>, vector<64x32xf32>
    tpu.vector_store %arg13[%c0_72, %c0_73], %279 {strides = array<i32>} : memref<64x32xf32, #tpu.memory_space<vmem>>, vector<64x32xf32>,
    return
  }
  func.func @transform_0(%arg0: i32) -> (i32, i32) {
    %c0_i32 = arith.constant 0 : i32
    %c0_i32_0 = arith.constant 0 : i32
    %c0_i32_1 = arith.constant 0 : i32
    return %c0_i32, %c0_i32_0 : i32, i32
  }
  func.func @transform_1(%arg0: i32) -> (i32, i32) {
    %c0_i32 = arith.constant 0 : i32
    %c0_i32_0 = arith.constant 0 : i32
    %c0_i32_1 = arith.constant 0 : i32
    return %c0_i32, %c0_i32_0 : i32, i32
  }
  func.func @transform_2(%arg0: i32) -> (i32, i32) {
    %c0_i32 = arith.constant 0 : i32
    %c0_i32_0 = arith.constant 0 : i32
    %c0_i32_1 = arith.constant 0 : i32
    return %c0_i32, %c0_i32_0 : i32, i32
  }
  func.func @transform_3(%arg0: i32) -> (i32, i32) {
    %c0_i32 = arith.constant 0 : i32
    %c0_i32_0 = arith.constant 0 : i32
    %c0_i32_1 = arith.constant 0 : i32
    return %c0_i32, %c0_i32_0 : i32, i32
  }
  func.func @transform_4(%arg0: i32) -> (i32, i32) {
    %c0_i32 = arith.constant 0 : i32
    %c0_i32_0 = arith.constant 0 : i32
    %c0_i32_1 = arith.constant 0 : i32
    return %c0_i32, %c0_i32_0 : i32, i32
  }
  func.func @transform_5(%arg0: i32) -> (i32, i32) {
    %c0_i32 = arith.constant 0 : i32
    %c0_i32_0 = arith.constant 0 : i32
    %c0_i32_1 = arith.constant 0 : i32
    return %c0_i32, %c0_i32_0 : i32, i32
  }
  func.func @transform_6(%arg0: i32) -> (i32, i32) {
    %c0_i32 = arith.constant 0 : i32
    %c0_i32_0 = arith.constant 0 : i32
    %c0_i32_1 = arith.constant 0 : i32
    return %c0_i32, %c0_i32_0 : i32, i32
  }
  func.func @transform_7(%arg0: i32) -> (i32, i32) {
    %c0_i32 = arith.constant 0 : i32
    %c0_i32_0 = arith.constant 0 : i32
    %c0_i32_1 = arith.constant 0 : i32
    return %c0_i32, %c0_i32_0 : i32, i32
  }
  func.func @transform_8(%arg0: i32) -> (i32, i32) {
    %c0_i32 = arith.constant 0 : i32
    %c0_i32_0 = arith.constant 0 : i32
    %c0_i32_1 = arith.constant 0 : i32
    return %c0_i32, %c0_i32_0 : i32, i32
  }
  func.func @transform_9(%arg0: i32) -> (i32, i32) {
    %c0_i32 = arith.constant 0 : i32
    %c0_i32_0 = arith.constant 0 : i32
    %c0_i32_1 = arith.constant 0 : i32
    return %c0_i32, %c0_i32_0 : i32, i32
  }
  func.func @transform_10(%arg0: i32) -> (i32, i32) {
    %c0_i32 = arith.constant 0 : i32
    %c0_i32_0 = arith.constant 0 : i32
    %c0_i32_1 = arith.constant 0 : i32
    return %c0_i32, %c0_i32_0 : i32, i32
  }
  func.func @transform_11(%arg0: i32) -> (i32, i32) {
    %c0_i32 = arith.constant 0 : i32
    %c0_i32_0 = arith.constant 0 : i32
    %c0_i32_1 = arith.constant 0 : i32
    return %c0_i32, %c0_i32_0 : i32, i32
  }
  func.func @transform_12(%arg0: i32) -> (i32, i32) {
    %c0_i32 = arith.constant 0 : i32
    %c0_i32_0 = arith.constant 0 : i32
    %c0_i32_1 = arith.constant 0 : i32
    return %c0_i32, %c0_i32_0 : i32, i32
  }
  func.func @transform_13(%arg0: i32) -> (i32, i32) {
    %c0_i32 = arith.constant 0 : i32
    %c0_i32_0 = arith.constant 0 : i32
    %c0_i32_1 = arith.constant 0 : i32
    return %c0_i32, %c0_i32_0 : i32, i32
  }
  func.func @transform_14(%arg0: i32) -> (i32, i32) {
    %c0_i32 = arith.constant 0 : i32
    %c0_i32_0 = arith.constant 0 : i32
    %c0_i32_1 = arith.constant 0 : i32
    return %c0_i32, %c0_i32_0 : i32, i32
  }
}

</mosaic_0001>

<llo_original>
// kernel: tpu_custom_call.1
$region0: #{tpu_custom_call.1}
  #allocation0 [shape = 'u32[]', space=smem, size = 0x4, offset = 0x4, fixed_abs, tag = 'smem constant byte address 0x4 - core index']
  #allocation1 [shape = 'u32[144,128]{1,0:T(1,128)}', space=vmem, size = 0x12000, scoped, tag = 'internal scratch']
  %s0 = inlined_call_operand.vmem [shape: f32[64,5], index: 0, kind: input, shape index: {}]
  %s1 = inlined_call_operand.hbm [shape: f32[8,64], index: 1, kind: input, shape index: {}]
  %s2 = inlined_call_operand.vmem [shape: f32[64,32], index: 2, kind: input, shape index: {}]
  %s3 = inlined_call_operand.hbm [shape: f32[5,25], index: 3, kind: input, shape index: {}]
  %s4 = inlined_call_operand.hbm [shape: f32[1,25], index: 4, kind: input, shape index: {}]
  %s5 = inlined_call_operand.hbm [shape: f32[25,192], index: 5, kind: input, shape index: {}]
  %s6 = inlined_call_operand.vmem [shape: f32[64,192], index: 6, kind: input, shape index: {}]
  %s7 = inlined_call_operand.vmem [shape: f32[1,192], index: 7, kind: input, shape index: {}]
  %s8 = inlined_call_operand.vmem [shape: f32[1,64], index: 8, kind: input, shape index: {}]
  %s9 = inlined_call_operand.vmem [shape: f32[64,64], index: 9, kind: input, shape index: {}]
  %s10 = inlined_call_operand.vmem [shape: f32[1,64], index: 10, kind: input, shape index: {}]
  %s11 = inlined_call_operand.hbm [shape: f32[64,64], index: 11, kind: output, shape index: {0}]
  %s12 = inlined_call_operand.vmem [shape: f32[64,32], index: 12, kind: output, shape index: {1}]
  %s13 = inlined_call_operand.vmem [shape: f32[64,32], index: 13, kind: output, shape index: {2}]
  %s14 = inlined_call_operand.vmem [shape: f32[64,32], index: 14, kind: output, shape index: {3}]
  %15 = xla_tuple %s11, %s12, %s13, %s14
  %s16 = sld [smem:[#allocation0]]
  $region94: #{tpu_custom_call.1} parent=0
    _
  %s18 = ssub.s32 1, %s16
  %s19 = scalar_select 0, %s18, %s16
  $region1: #{tpu_custom_call.1} parent=0
    #allocation2 [shape = 'u8[4096]{0}', space=vmem, size = 0x1000, scoped, tag = 'input window, operand 1, single buffered']
    #allocation3 [shape = 's32[1]{0}', space=sflag, size = 0x4, scoped, tag = 'scoped memory for tpu_custom_call.1']
    #allocation4 [shape = 's32[1]{0}', space=sflag, size = 0x4, scoped, tag = 'scoped memory for tpu_custom_call.1']
    #allocation5 [shape = 'u8[4096]{0}', space=vmem, size = 0x1000, scoped, tag = 'input window, operand 3, single buffered']
    #allocation6 [shape = 's32[1]{0}', space=sflag, size = 0x4, scoped, tag = 'scoped memory for tpu_custom_call.1']
    #allocation7 [shape = 'u8[512]{0}', space=vmem, size = 0x400, scoped, tag = 'input window, operand 4, single buffered']
    #allocation8 [shape = 'u8[32768]{0}', space=vmem, size = 0x8000, scoped, tag = 'input window, operand 5, single buffered']
    #allocation9 [shape = 's32[1]{0}', space=sflag, size = 0x4, scoped, tag = 'scoped memory for tpu_custom_call.1']
    #allocation10 [shape = 'u8[32768]{0}', space=vmem, size = 0x8000, scoped, tag = 'output window, operand 0, single buffered']
    %20 = vsyncpa [#allocation3], 0
    %21 = vsyncpa [#allocation6], 0
    %22 = vsyncpa [#allocation9], 0
    %23 = vsyncpa [#allocation4], 0
    // Predicated region
    $region2: #{tpu_custom_call.1} parent=1 // pred_check
      _
    $region3: #{tpu_custom_call.1} parent=1 // pred_check_branch
      %25 = sbr.rel (0) target = $region5
    $region4: #{tpu_custom_call.1} parent=1 // pred_region
      _
    $region5: #{tpu_custom_call.1} parent=1 // pred_fallthru
      _
    // Predicated region
    $region6: #{tpu_custom_call.1} parent=1 // pred_check
      _
    $region7: #{tpu_custom_call.1} parent=1 // pred_check_branch
      %27 = sbr.rel (0) target = $region9
    $region8: #{tpu_custom_call.1} parent=1 // pred_region
      %s29 = ssub.s32 128, 128
      %30 = vsyncadd [#allocation3], %s29
      %s32 = sshll.u32 [#allocation2], 4
      %s33 = int_to_ptr.vmem [resolvable:$true] %s32
      %35 = dma.hbm_to_vmem [thread:$0]  %s1, 128, %s33, [#allocation3]
    $region9: #{tpu_custom_call.1} parent=1 // pred_fallthru
      _
    // Predicated region
    $region10: #{tpu_custom_call.1} parent=1 // pred_check
      _
    $region11: #{tpu_custom_call.1} parent=1 // pred_check_branch
      %37 = sbr.rel (0) target = $region13
    $region12: #{tpu_custom_call.1} parent=1 // pred_region
      _
    $region13: #{tpu_custom_call.1} parent=1 // pred_fallthru
      _
    // Predicated region
    $region14: #{tpu_custom_call.1} parent=1 // pred_check
      _
    $region15: #{tpu_custom_call.1} parent=1 // pred_check_branch
      %39 = sbr.rel (0) target = $region17
    $region16: #{tpu_custom_call.1} parent=1 // pred_region
      %s41 = ssub.s32 128, 128
      %42 = vsyncadd [#allocation6], %s41
      %s44 = sshll.u32 [#allocation5], 4
      %s45 = int_to_ptr.vmem [resolvable:$true] %s44
      %47 = dma.hbm_to_vmem [thread:$0]  %s3, 128, %s45, [#allocation6]
    $region17: #{tpu_custom_call.1} parent=1 // pred_fallthru
      _
    // Predicated region
    $region18: #{tpu_custom_call.1} parent=1 // pred_check
      _
    $region19: #{tpu_custom_call.1} parent=1 // pred_check_branch
      %49 = sbr.rel (0) target = $region21
    $region20: #{tpu_custom_call.1} parent=1 // pred_region
      %s51 = ssub.s32 16, 16
      %52 = vsyncadd [#allocation6], %s51
      %s54 = sshll.u32 [#allocation7], 4
      %s55 = int_to_ptr.vmem [resolvable:$true] %s54
      %57 = dma.hbm_to_vmem [thread:$0]  %s4, 16, %s55, [#allocation6]
    $region21: #{tpu_custom_call.1} parent=1 // pred_fallthru
      _
    // Predicated region
    $region22: #{tpu_custom_call.1} parent=1 // pred_check
      _
    $region23: #{tpu_custom_call.1} parent=1 // pred_check_branch
      %59 = sbr.rel (0) target = $region25
    $region24: #{tpu_custom_call.1} parent=1 // pred_region
      %s61 = ssub.s32 1024, 1024
      %62 = vsyncadd [#allocation9], %s61
      %s63 = sshll.u32 [#allocation8], 4
      %s64 = int_to_ptr.vmem [resolvable:$true] %s63
      %69 = dma.hbm_to_vmem [thread:$0]  %s5, 1024, %s64, [#allocation9], 256, 256, 16
    $region25: #{tpu_custom_call.1} parent=1 // pred_fallthru
      _
    // Predicated region
    $region26: #{tpu_custom_call.1} parent=1 // pred_check
      _
    $region27: #{tpu_custom_call.1} parent=1 // pred_check_branch
      %71 = sbr.rel (0) target = $region29
    $region28: #{tpu_custom_call.1} parent=1 // pred_region
      _
    $region29: #{tpu_custom_call.1} parent=1 // pred_fallthru
      _
    // Predicated region
    $region30: #{tpu_custom_call.1} parent=1 // pred_check
      _
    $region31: #{tpu_custom_call.1} parent=1 // pred_check_branch
      %73 = sbr.rel (0) target = $region33
    $region32: #{tpu_custom_call.1} parent=1 // pred_region
      _
    $region33: #{tpu_custom_call.1} parent=1 // pred_fallthru
      _
    // Predicated region
    $region34: #{tpu_custom_call.1} parent=1 // pred_check
      _
    $region35: #{tpu_custom_call.1} parent=1 // pred_check_branch
      %75 = sbr.rel (0) target = $region37
    $region36: #{tpu_custom_call.1} parent=1 // pred_region
      _
    $region37: #{tpu_custom_call.1} parent=1 // pred_fallthru
      _
    // Predicated region
    $region38: #{tpu_custom_call.1} parent=1 // pred_check
      _
    $region39: #{tpu_custom_call.1} parent=1 // pred_check_branch
      %77 = sbr.rel (0) target = $region41
    $region40: #{tpu_custom_call.1} parent=1 // pred_region
      _
    $region41: #{tpu_custom_call.1} parent=1 // pred_fallthru
      _
    // Predicated region
    $region42: #{tpu_custom_call.1} parent=1 // pred_check
      _
    $region43: #{tpu_custom_call.1} parent=1 // pred_check_branch
      %79 = sbr.rel (0) target = $region45
    $region44: #{tpu_custom_call.1} parent=1 // pred_region
      _
    $region45: #{tpu_custom_call.1} parent=1 // pred_fallthru
      _
    // Predicated region
    $region46: #{tpu_custom_call.1} parent=1 // pred_check
      _
    $region47: #{tpu_custom_call.1} parent=1 // pred_check_branch
      %81 = sbr.rel (0) target = $region49
    $region48: #{tpu_custom_call.1} parent=1 // pred_region
      %82 = dma.done [#allocation3], 128
    $region49: #{tpu_custom_call.1} parent=1 // pred_fallthru
      _
    // Predicated region
    $region50: #{tpu_custom_call.1} parent=1 // pred_check
      _
    $region51: #{tpu_custom_call.1} parent=1 // pred_check_branch
      %84 = sbr.rel (0) target = $region53
    $region52: #{tpu_custom_call.1} parent=1 // pred_region
      %85 = dma.done [#allocation6], 128
    $region53: #{tpu_custom_call.1} parent=1 // pred_fallthru
      _
    // Predicated region
    $region54: #{tpu_custom_call.1} parent=1 // pred_check
      _
    $region55: #{tpu_custom_call.1} parent=1 // pred_check_branch
      %87 = sbr.rel (0) target = $region57
    $region56: #{tpu_custom_call.1} parent=1 // pred_region
      %88 = dma.done [#allocation6], 16
    $region57: #{tpu_custom_call.1} parent=1 // pred_fallthru
      _
    // Predicated region
    $region58: #{tpu_custom_call.1} parent=1 // pred_check
      _
    $region59: #{tpu_custom_call.1} parent=1 // pred_check_branch
      %90 = sbr.rel (0) target = $region61
    $region60: #{tpu_custom_call.1} parent=1 // pred_region
      %91 = dma.done [#allocation9], 1024
    $region61: #{tpu_custom_call.1} parent=1 // pred_fallthru
      _
    %v92 = vld [vmem:[%s0] sm:$0xff]
    %v93 = vld [vmem:[%s0 + $0x8] sm:$0xff]
    %v94 = vld [vmem:[%s0 + $0x10] sm:$0xff]
    %v95 = vld [vmem:[%s0 + $0x18] sm:$0xff]
    %v96 = vld [vmem:[%s0 + $0x20] sm:$0xff]
    %v97 = vld [vmem:[%s0 + $0x28] sm:$0xff]
    %v98 = vld [vmem:[%s0 + $0x30] sm:$0xff]
    %v99 = vld [vmem:[%s0 + $0x38] sm:$0xff]
    %v100 = vld [vmem:[#allocation5] sm:$0x1f]
    %v101 = vld [vmem:[#allocation7] sm:$0x1]
    %v103 = vlaneseq
    %v104 = vshrl.u32 %v103, 7
    %v105 = vsub.s32 0, %v104
    %v106 = vrot.slane %v101, %v105
    %vm108 = vcmask 39936
    %v110 = vsel %vm108, %v92, 0
    %v113 = vsel %vm108, %v93, 0
    %v116 = vsel %vm108, %v94, 0
    %v119 = vsel %vm108, %v95, 0
    %v122 = vsel %vm108, %v96, 0
    %v125 = vsel %vm108, %v97, 0
    %v128 = vsel %vm108, %v98, 0
    %v131 = vsel %vm108, %v99, 0
    %vm133 = vcmask 1044480
    %v135 = vsel %vm133, %v100, 0
    %137 = vmatprep.subr.mxu0 0.0
    %138 = vmatpush1.msra.mxu0 %v135
    %139 = vmatprep.subr.mxu0 0.0
    %140 = vmatpush1.msra.mxu0 0.0
    %141 = vmatprep.subr.mxu0 0.0
    %142 = vmatpush1.msra.mxu0 0.0
    %143 = vmatprep.subr.mxu0 0.0
    %144 = vmatpush1.msra.mxu0 0.0
    %145 = vmatprep.subr.mxu0 0.0
    %146 = vmatpush1.msra.mxu0 0.0
    %147 = vmatprep.subr.mxu0 0.0
    %148 = vmatpush1.msra.mxu0 0.0
    %149 = vmatprep.subr.mxu0 0.0
    %150 = vmatpush1.msra.mxu0 0.0
    %151 = vmatprep.subr.mxu0 0.0
    %152 = vmatpush1.msra.mxu0 0.0
    %153 = vmatprep.subr.mxu0 0.0
    %154 = vmatpush1.msra.mxu0 0.0
    %155 = vmatprep.subr.mxu0 0.0
    %156 = vmatpush1.msra.mxu0 0.0
    %157 = vmatprep.subr.mxu0 0.0
    %158 = vmatpush1.msra.mxu0 0.0
    %159 = vmatprep.subr.mxu0 0.0
    %160 = vmatpush1.msra.mxu0 0.0
    %161 = vmatprep.subr.mxu0 0.0
    %162 = vmatpush1.msra.mxu0 0.0
    %163 = vmatprep.subr.mxu0 0.0
    %164 = vmatpush1.msra.mxu0 0.0
    %165 = vmatprep.subr.mxu0 0.0
    %166 = vmatpush1.msra.mxu0 0.0
    %167 = vmatprep.subr.mxu0 0.0
    %168 = vmatpush1.msra.mxu0 0.0
    %169 = vmatprep.subr.mxu0 0.0
    %170 = vmatpush1.msra.mxu0 0.0
    %171 = vmatprep.subr.mxu0 0.0
    %172 = vmatpush1.msra.mxu0 0.0
    %173 = vmatprep.subr.mxu0 0.0
    %174 = vmatpush1.msra.mxu0 0.0
    %175 = vmatprep.subr.mxu0 0.0
    %176 = vmatpush1.msra.mxu0 0.0
    %177 = vmatprep.subr.mxu0 0.0
    %178 = vmatpush1.msra.mxu0 0.0
    %179 = vmatprep.subr.mxu0 0.0
    %180 = vmatpush1.msra.mxu0 0.0
    %181 = vmatprep.subr.mxu0 0.0
    %182 = vmatpush1.msra.mxu0 0.0
    %183 = vmatprep.subr.mxu0 0.0
    %184 = vmatpush1.msra.mxu0 0.0
    %185 = vmatprep.subr.mxu0 0.0
    %186 = vmatpush1.msra.mxu0 0.0
    %187 = vmatprep.subr.mxu0 0.0
    %188 = vmatpush1.msra.mxu0 0.0
    %189 = vmatprep.subr.mxu0 0.0
    %190 = vmatpush1.msra.mxu0 0.0
    %191 = vmatprep.subr.mxu0 0.0
    %192 = vmatpush1.msra.mxu0 0.0
    %193 = vmatprep.subr.mxu0 0.0
    %194 = vmatpush1.msra.mxu0 0.0
    %195 = vmatprep.subr.mxu0 0.0
    %196 = vmatpush1.msra.mxu0 0.0
    %197 = vmatprep.subr.mxu0 0.0
    %198 = vmatpush1.msra.mxu0 0.0
    %199 = vmatprep.subr.mxu0 0.0
    %200 = vmatpush1.msra.mxu0 0.0
    %201 = vmatprep.mubr.f32.mxu0 0.0
    %202 = vmatmul.mubr.f32.gmra.mrb[0].mxu0 %v110
    %v203 = vpop.f32.mrb[0].mxu0
    %v204 = vadd.f32 %v106, %v203
    %v205 = vpop.f32.mrb[0].mxu0
    %206 = vmatprep.mubr.f32.mxu0 0.0
    %207 = vmatmul.mubr.f32.gmra.mrb[0].mxu0 %v113
    %v208 = vpop.f32.mrb[0].mxu0
    %v209 = vadd.f32 %v106, %v208
    %v210 = vpop.f32.mrb[0].mxu0
    %211 = vmatprep.mubr.f32.mxu0 0.0
    %212 = vmatmul.mubr.f32.gmra.mrb[0].mxu0 %v116
    %v213 = vpop.f32.mrb[0].mxu0
    %v214 = vadd.f32 %v106, %v213
    %v215 = vpop.f32.mrb[0].mxu0
    %216 = vmatprep.mubr.f32.mxu0 0.0
    %217 = vmatmul.mubr.f32.gmra.mrb[0].mxu0 %v119
    %v218 = vpop.f32.mrb[0].mxu0
    %v219 = vadd.f32 %v106, %v218
    %v220 = vpop.f32.mrb[0].mxu0
    %221 = vmatprep.mubr.f32.mxu0 0.0
    %222 = vmatmul.mubr.f32.gmra.mrb[0].mxu0 %v122
    %v223 = vpop.f32.mrb[0].mxu0
    %v224 = vadd.f32 %v106, %v223
    %v225 = vpop.f32.mrb[0].mxu0
    %226 = vmatprep.mubr.f32.mxu0 0.0
    %227 = vmatmul.mubr.f32.gmra.mrb[0].mxu0 %v125
    %v228 = vpop.f32.mrb[0].mxu0
    %v229 = vadd.f32 %v106, %v228
    %v230 = vpop.f32.mrb[0].mxu0
    %231 = vmatprep.mubr.f32.mxu0 0.0
    %232 = vmatmul.mubr.f32.gmra.mrb[0].mxu0 %v128
    %v233 = vpop.f32.mrb[0].mxu0
    %v234 = vadd.f32 %v106, %v233
    %v235 = vpop.f32.mrb[0].mxu0
    %236 = vmatprep.mubr.f32.mxu0 0.0
    %237 = vmatmul.mubr.f32.gmra.mrb[0].mxu0 %v131
    %v238 = vpop.f32.mrb[0].mxu0
    %v239 = vadd.f32 %v106, %v238
    %v240 = vpop.f32.mrb[0].mxu0
    %241 = vdwg.mxu0
    %v242 = vmax.f32 %v204, 0.0
    %v243 = vmax.f32 %v209, 0.0
    %v244 = vmax.f32 %v214, 0.0
    %v245 = vmax.f32 %v219, 0.0
    %v246 = vmax.f32 %v224, 0.0
    %v247 = vmax.f32 %v229, 0.0
    %v248 = vmax.f32 %v234, 0.0
    %v249 = vmax.f32 %v239, 0.0
    %v250 = vld [vmem:[#allocation8] sm:$0xff]
    %v251 = vld [vmem:[#allocation8 + $0x8] sm:$0xff]
    %v252 = vld [vmem:[#allocation8 + $0x10] sm:$0xff]
    %v253 = vld [vmem:[#allocation8 + $0x18] sm:$0xff]
    %v254 = vld [vmem:[#allocation8 + $0x20] sm:$0xff]
    %v255 = vld [vmem:[#allocation8 + $0x28] sm:$0xff]
    %v256 = vld [vmem:[#allocation8 + $0x30] sm:$0x1]
    %v257 = vld [vmem:[#allocation8 + $0x38] sm:$0x1]
    %v258 = vld [vmem:[%s7] sm:$0x3]
    %v260 = vlaneseq
    %v261 = vshrl.u32 %v260, 7
    %v262 = vsub.s32 0, %v261
    %v263 = vrot.slane %v258, %v262
    %v264 = vlaneseq
    %v265 = vshrl.u32 %v264, 7
    %v266 = vsub.s32 1, %v265
    %v267 = vrot.slane %v258, %v266
    %vm270 = vcmask 203776
    %v272 = vsel %vm270, %v242, 0
    %v275 = vsel %vm270, %v243, 0
    %v278 = vsel %vm270, %v244, 0
    %v281 = vsel %vm270, %v245, 0
    %v284 = vsel %vm270, %v246, 0
    %v287 = vsel %vm270, %v247, 0
    %v290 = vsel %vm270, %v248, 0
    %v293 = vsel %vm270, %v249, 0
    %vm295 = vcmask 1040384
    %v297 = vsel %vm295, %v256, 0
    %v300 = vsel %vm295, %v257, 0
    %302 = vmatprep.subr.mxu0 %v251
    %303 = vmatpush1.msra.mxu0 %v250
    %304 = vmatprep.subr.mxu0 %v253
    %305 = vmatpush1.msra.mxu0 %v252
    %306 = vmatprep.subr.mxu0 %v255
    %307 = vmatpush1.msra.mxu0 %v254
    %308 = vmatprep.subr.mxu0 %v300
    %309 = vmatpush1.msra.mxu0 %v297
    %310 = vmatprep.subr.mxu0 0.0
    %311 = vmatpush1.msra.mxu0 0.0
    %312 = vmatprep.subr.mxu0 0.0
    %313 = vmatpush1.msra.mxu0 0.0
    %314 = vmatprep.subr.mxu0 0.0
    %315 = vmatpush1.msra.mxu0 0.0
    %316 = vmatprep.subr.mxu0 0.0
    %317 = vmatpush1.msra.mxu0 0.0
    %318 = vmatprep.subr.mxu0 0.0
    %319 = vmatpush1.msra.mxu0 0.0
    %320 = vmatprep.subr.mxu0 0.0
    %321 = vmatpush1.msra.mxu0 0.0
    %322 = vmatprep.subr.mxu0 0.0
    %323 = vmatpush1.msra.mxu0 0.0
    %324 = vmatprep.subr.mxu0 0.0
    %325 = vmatpush1.msra.mxu0 0.0
    %326 = vmatprep.subr.mxu0 0.0
    %327 = vmatpush1.msra.mxu0 0.0
    %328 = vmatprep.subr.mxu0 0.0
    %329 = vmatpush1.msra.mxu0 0.0
    %330 = vmatprep.subr.mxu0 0.0
    %331 = vmatpush1.msra.mxu0 0.0
    %332 = vmatprep.subr.mxu0 0.0
    %333 = vmatpush1.msra.mxu0 0.0
    %334 = vmatprep.subr.mxu0 0.0
    %335 = vmatpush1.msra.mxu0 0.0
    %336 = vmatprep.subr.mxu0 0.0
    %337 = vmatpush1.msra.mxu0 0.0
    %338 = vmatprep.subr.mxu0 0.0
    %339 = vmatpush1.msra.mxu0 0.0
    %340 = vmatprep.subr.mxu0 0.0
    %341 = vmatpush1.msra.mxu0 0.0
    %342 = vmatprep.subr.mxu0 0.0
    %343 = vmatpush1.msra.mxu0 0.0
    %344 = vmatprep.subr.mxu0 0.0
    %345 = vmatpush1.msra.mxu0 0.0
    %346 = vmatprep.subr.mxu0 0.0
    %347 = vmatpush1.msra.mxu0 0.0
    %348 = vmatprep.subr.mxu0 0.0
    %349 = vmatpush1.msra.mxu0 0.0
    %350 = vmatprep.subr.mxu0 0.0
    %351 = vmatpush1.msra.mxu0 0.0
    %352 = vmatprep.subr.mxu0 0.0
    %353 = vmatpush1.msra.mxu0 0.0
    %354 = vmatprep.subr.mxu0 0.0
    %355 = vmatpush1.msra.mxu0 0.0
    %356 = vmatprep.subr.mxu0 0.0
    %357 = vmatpush1.msra.mxu0 0.0
    %358 = vmatprep.subr.mxu0 0.0
    %359 = vmatpush1.msra.mxu0 0.0
    %360 = vmatprep.subr.mxu0 0.0
    %361 = vmatpush1.msra.mxu0 0.0
    %362 = vmatprep.subr.mxu0 0.0
    %363 = vmatpush1.msra.mxu0 0.0
    %364 = vmatprep.subr.mxu0 0.0
    %365 = vmatpush1.msra.mxu0 0.0
    %366 = vmatprep.mubr.f32.mxu0 0.0
    %367 = vmatmul.mubr.f32.gmra.mrb[0].mxu0 %v272
    %v368 = vpop.f32.mrb[0].mxu0
    %v369 = vadd.f32 %v263, %v368
    %v370 = vpop.f32.mrb[0].mxu0
    %v371 = vadd.f32 %v267, %v370
    %372 = vmatprep.mubr.f32.mxu0 0.0
    %373 = vmatmul.mubr.f32.gmra.mrb[0].mxu0 %v275
    %v374 = vpop.f32.mrb[0].mxu0
    %v375 = vadd.f32 %v263, %v374
    %v376 = vpop.f32.mrb[0].mxu0
    %v377 = vadd.f32 %v267, %v376
    %378 = vmatprep.mubr.f32.mxu0 0.0
    %379 = vmatmul.mubr.f32.gmra.mrb[0].mxu0 %v278
    %v380 = vpop.f32.mrb[0].mxu0
    %v381 = vadd.f32 %v263, %v380
    %v382 = vpop.f32.mrb[0].mxu0
    %v383 = vadd.f32 %v267, %v382
    %384 = vmatprep.mubr.f32.mxu0 0.0
    %385 = vmatmul.mubr.f32.gmra.mrb[0].mxu0 %v281
    %v386 = vpop.f32.mrb[0].mxu0
    %v387 = vadd.f32 %v263, %v386
    %v388 = vpop.f32.mrb[0].mxu0
    %v389 = vadd.f32 %v267, %v388
    %390 = vmatprep.mubr.f32.mxu0 0.0
    %391 = vmatmul.mubr.f32.gmra.mrb[0].mxu0 %v284
    %v392 = vpop.f32.mrb[0].mxu0
    %v393 = vadd.f32 %v263, %v392
    %v394 = vpop.f32.mrb[0].mxu0
    %v395 = vadd.f32 %v267, %v394
    %396 = vmatprep.mubr.f32.mxu0 0.0
    %397 = vmatmul.mubr.f32.gmra.mrb[0].mxu0 %v287
    %v398 = vpop.f32.mrb[0].mxu0
    %v399 = vadd.f32 %v263, %v398
    %v400 = vpop.f32.mrb[0].mxu0
    %v401 = vadd.f32 %v267, %v400
    %402 = vmatprep.mubr.f32.mxu0 0.0
    %403 = vmatmul.mubr.f32.gmra.mrb[0].mxu0 %v290
    %v404 = vpop.f32.mrb[0].mxu0
    %v405 = vadd.f32 %v263, %v404
    %v406 = vpop.f32.mrb[0].mxu0
    %v407 = vadd.f32 %v267, %v406
    %408 = vmatprep.mubr.f32.mxu0 0.0
    %409 = vmatmul.mubr.f32.gmra.mrb[0].mxu0 %v293
    %v410 = vpop.f32.mrb[0].mxu0
    %v411 = vadd.f32 %v263, %v410
    %v412 = vpop.f32.mrb[0].mxu0
    %v413 = vadd.f32 %v267, %v412
    %414 = vdwg.mxu0
    %v415 = vld [vmem:[%s6] sm:$0xff]
    %v416 = vld [vmem:[%s6 + $0x8] sm:$0xff]
    %v417 = vld [vmem:[%s6 + $0x10] sm:$0xff]
    %v418 = vld [vmem:[%s6 + $0x18] sm:$0xff]
    %v419 = vld [vmem:[%s6 + $0x20] sm:$0xff]
    %v420 = vld [vmem:[%s6 + $0x28] sm:$0xff]
    %v421 = vld [vmem:[%s6 + $0x30] sm:$0xff]
    %v422 = vld [vmem:[%s6 + $0x38] sm:$0xff]
    %v423 = vld [vmem:[%s6 + $0x40] sm:$0xff]
    %v424 = vld [vmem:[%s6 + $0x48] sm:$0xff]
    %v425 = vld [vmem:[%s6 + $0x50] sm:$0xff]
    %v426 = vld [vmem:[%s6 + $0x58] sm:$0xff]
    %v427 = vld [vmem:[%s6 + $0x60] sm:$0xff]
    %v428 = vld [vmem:[%s6 + $0x68] sm:$0xff]
    %v429 = vld [vmem:[%s6 + $0x70] sm:$0xff]
    %v430 = vld [vmem:[%s6 + $0x78] sm:$0xff]
    %v431 = vld [vmem:[%s8] sm:$0x1]
    %v432 = vld [vmem:[#allocation2] sm:$0xff]
    %vm433 = vcmask 523264
    %v435 = vsel %vm433, %v432, 0
    %437 = vmatprep.subr.mxu0 %v416
    %438 = vmatpush1.msra.mxu0 %v415
    %439 = vmatprep.subr.mxu0 %v418
    %440 = vmatpush1.msra.mxu0 %v417
    %441 = vmatprep.subr.mxu0 %v420
    %442 = vmatpush1.msra.mxu0 %v419
    %443 = vmatprep.subr.mxu0 %v422
    %444 = vmatpush1.msra.mxu0 %v421
    %445 = vmatprep.subr.mxu0 %v424
    %446 = vmatpush1.msra.mxu0 %v423
    %447 = vmatprep.subr.mxu0 %v426
    %448 = vmatpush1.msra.mxu0 %v425
    %449 = vmatprep.subr.mxu0 %v428
    %450 = vmatpush1.msra.mxu0 %v427
    %451 = vmatprep.subr.mxu0 %v430
    %452 = vmatpush1.msra.mxu0 %v429
    %453 = vmatprep.subr.mxu0 0.0
    %454 = vmatpush1.msra.mxu0 0.0
    %455 = vmatprep.subr.mxu0 0.0
    %456 = vmatpush1.msra.mxu0 0.0
    %457 = vmatprep.subr.mxu0 0.0
    %458 = vmatpush1.msra.mxu0 0.0
    %459 = vmatprep.subr.mxu0 0.0
    %460 = vmatpush1.msra.mxu0 0.0
    %461 = vmatprep.subr.mxu0 0.0
    %462 = vmatpush1.msra.mxu0 0.0
    %463 = vmatprep.subr.mxu0 0.0
    %464 = vmatpush1.msra.mxu0 0.0
    %465 = vmatprep.subr.mxu0 0.0
    %466 = vmatpush1.msra.mxu0 0.0
    %467 = vmatprep.subr.mxu0 0.0
    %468 = vmatpush1.msra.mxu0 0.0
    %469 = vmatprep.subr.mxu0 0.0
    %470 = vmatpush1.msra.mxu0 0.0
    %471 = vmatprep.subr.mxu0 0.0
    %472 = vmatpush1.msra.mxu0 0.0
    %473 = vmatprep.subr.mxu0 0.0
    %474 = vmatpush1.msra.mxu0 0.0
    %475 = vmatprep.subr.mxu0 0.0
    %476 = vmatpush1.msra.mxu0 0.0
    %477 = vmatprep.subr.mxu0 0.0
    %478 = vmatpush1.msra.mxu0 0.0
    %479 = vmatprep.subr.mxu0 0.0
    %480 = vmatpush1.msra.mxu0 0.0
    %481 = vmatprep.subr.mxu0 0.0
    %482 = vmatpush1.msra.mxu0 0.0
    %483 = vmatprep.subr.mxu0 0.0
    %484 = vmatpush1.msra.mxu0 0.0
    %485 = vmatprep.subr.mxu0 0.0
    %486 = vmatpush1.msra.mxu0 0.0
    %487 = vmatprep.subr.mxu0 0.0
    %488 = vmatpush1.msra.mxu0 0.0
    %489 = vmatprep.subr.mxu0 0.0
    %490 = vmatpush1.msra.mxu0 0.0
    %491 = vmatprep.subr.mxu0 0.0
    %492 = vmatpush1.msra.mxu0 0.0
    %493 = vmatprep.subr.mxu0 0.0
    %494 = vmatpush1.msra.mxu0 0.0
    %495 = vmatprep.subr.mxu0 0.0
    %496 = vmatpush1.msra.mxu0 0.0
    %497 = vmatprep.subr.mxu0 0.0
    %498 = vmatpush1.msra.mxu0 0.0
    %499 = vmatprep.subr.mxu0 0.0
    %500 = vmatpush1.msra.mxu0 0.0
    %501 = vmatprep.mubr.f32.mxu0 0.0
    %502 = vmatmul.mubr.f32.gmra.mrb[0].mxu0 %v435
    %v503 = vpop.f32.mrb[0].mxu0
    %v504 = vadd.f32 0.0, %v503
    %v505 = vpop.f32.mrb[0].mxu0
    %v506 = vadd.f32 0.0, %v505
    %507 = vdwg.mxu0
    %v508 = vadd.f32 %v369, %v504
    %v509 = vxor.u32 %v508, 2147483648
    %v510 = vmul.f32 %v509, 1.442695
    %v511 = vpow.pop %v510
    %v512 = vadd.f32 %v511, 1.0
    %v513 = vrcp.pop %v512
    %v514 = vmul.f32 1.0, %v513
    %v516 = vlaneseq
    %v517 = vshrl.u32 %v516, 7
    %v518 = vsub.s32 0, %v517
    %v519 = vrot.slane %v431, %v518
    %v521 = vadd.f32 %v506, %v519
    %v522 = vmul.f32 %v514, %v521
    %v523 = vadd.f32 %v371, %v522
    %v524 = vtanh.pop %v523
    %v525 = vsub.f32 1.0, %v514
    %527 = vrot.lane.b32.xlu0 %v524, 64
    %v528 = vpop.permute.xlu0 %527
    %v530 = vmul.f32 %v525, %v528
    %531 = vrot.lane.b32.xlu0 %v432, 64
    %v532 = vpop.permute.xlu0 %531
    %v534 = vmul.f32 %v514, %v532
    %v535 = vadd.f32 %v530, %v534
    %537 = vrot.lane.b32.xlu0 %v535, 64
    %v538 = vpop.permute.xlu0 %537
    %540 = vst.msk [vmem:[#allocation10] sm:$0xff] %vm433, %v538
    %v541 = vsel %vm433, %v538, 0
    %543 = vmatprep.subr.mxu0 %v416
    %544 = vmatpush1.msra.mxu0 %v415
    %545 = vmatprep.subr.mxu0 %v418
    %546 = vmatpush1.msra.mxu0 %v417
    %547 = vmatprep.subr.mxu0 %v420
    %548 = vmatpush1.msra.mxu0 %v419
    %549 = vmatprep.subr.mxu0 %v422
    %550 = vmatpush1.msra.mxu0 %v421
    %551 = vmatprep.subr.mxu0 %v424
    %552 = vmatpush1.msra.mxu0 %v423
    %553 = vmatprep.subr.mxu0 %v426
    %554 = vmatpush1.msra.mxu0 %v425
    %555 = vmatprep.subr.mxu0 %v428
    %556 = vmatpush1.msra.mxu0 %v427
    %557 = vmatprep.subr.mxu0 %v430
    %558 = vmatpush1.msra.mxu0 %v429
    %559 = vmatprep.subr.mxu0 0.0
    %560 = vmatpush1.msra.mxu0 0.0
    %561 = vmatprep.subr.mxu0 0.0
    %562 = vmatpush1.msra.mxu0 0.0
    %563 = vmatprep.subr.mxu0 0.0
    %564 = vmatpush1.msra.mxu0 0.0
    %565 = vmatprep.subr.mxu0 0.0
    %566 = vmatpush1.msra.mxu0 0.0
    %567 = vmatprep.subr.mxu0 0.0
    %568 = vmatpush1.msra.mxu0 0.0
    %569 = vmatprep.subr.mxu0 0.0
    %570 = vmatpush1.msra.mxu0 0.0
    %571 = vmatprep.subr.mxu0 0.0
    %572 = vmatpush1.msra.mxu0 0.0
    %573 = vmatprep.subr.mxu0 0.0
    %574 = vmatpush1.msra.mxu0 0.0
    %575 = vmatprep.subr.mxu0 0.0
    %576 = vmatpush1.msra.mxu0 0.0
    %577 = vmatprep.subr.mxu0 0.0
    %578 = vmatpush1.msra.mxu0 0.0
    %579 = vmatprep.subr.mxu0 0.0
    %580 = vmatpush1.msra.mxu0 0.0
    %581 = vmatprep.subr.mxu0 0.0
    %582 = vmatpush1.msra.mxu0 0.0
    %583 = vmatprep.subr.mxu0 0.0
    %584 = vmatpush1.msra.mxu0 0.0
    %585 = vmatprep.subr.mxu0 0.0
    %586 = vmatpush1.msra.mxu0 0.0
    %587 = vmatprep.subr.mxu0 0.0
    %588 = vmatpush1.msra.mxu0 0.0
    %589 = vmatprep.subr.mxu0 0.0
    %590 = vmatpush1.msra.mxu0 0.0
    %591 = vmatprep.subr.mxu0 0.0
    %592 = vmatpush1.msra.mxu0 0.0
    %593 = vmatprep.subr.mxu0 0.0
    %594 = vmatpush1.msra.mxu0 0.0
    %595 = vmatprep.subr.mxu0 0.0
    %596 = vmatpush1.msra.mxu0 0.0
    %597 = vmatprep.subr.mxu0 0.0
    %598 = vmatpush1.msra.mxu0 0.0
    %599 = vmatprep.subr.mxu0 0.0
    %600 = vmatpush1.msra.mxu0 0.0
    %601 = vmatprep.subr.mxu0 0.0
    %602 = vmatpush1.msra.mxu0 0.0
    %603 = vmatprep.subr.mxu0 0.0
    %604 = vmatpush1.msra.mxu0 0.0
    %605 = vmatprep.subr.mxu0 0.0
    %606 = vmatpush1.msra.mxu0 0.0
    %607 = vmatprep.mubr.f32.mxu0 0.0
    %608 = vmatmul.mubr.f32.gmra.mrb[0].mxu0 %v541
    %v609 = vpop.f32.mrb[0].mxu0
    %v610 = vadd.f32 0.0, %v609
    %v611 = vpop.f32.mrb[0].mxu0
    %v612 = vadd.f32 0.0, %v611
    %613 = vdwg.mxu0
    %v614 = vadd.f32 %v375, %v610
    %v615 = vxor.u32 %v614, 2147483648
    %v616 = vmul.f32 %v615, 1.442695
    %v617 = vpow.pop %v616
    %v618 = vadd.f32 %v617, 1.0
    %v619 = vrcp.pop %v618
    %v620 = vmul.f32 1.0, %v619
    %v621 = vadd.f32 %v612, %v519
    %v622 = vmul.f32 %v620, %v621
    %v623 = vadd.f32 %v377, %v622
    %v624 = vtanh.pop %v623
    %v625 = vsub.f32 1.0, %v620
    %627 = vrot.lane.b32.xlu0 %v624, 64
    %v628 = vpop.permute.xlu0 %627
    %v630 = vmul.f32 %v625, %v628
    %v631 = vmul.f32 %v620, %v535
    %v632 = vadd.f32 %v630, %v631
    %634 = vrot.lane.b32.xlu0 %v632, 64
    %v635 = vpop.permute.xlu0 %634
    %637 = vst.msk [vmem:[#allocation10 + $0x8] sm:$0xff] %vm433, %v635
    %v638 = vsel %vm433, %v635, 0
    %640 = vmatprep.subr.mxu0 %v416
    %641 = vmatpush1.msra.mxu0 %v415
    %642 = vmatprep.subr.mxu0 %v418
    %643 = vmatpush1.msra.mxu0 %v417
    %644 = vmatprep.subr.mxu0 %v420
    %645 = vmatpush1.msra.mxu0 %v419
    %646 = vmatprep.subr.mxu0 %v422
    %647 = vmatpush1.msra.mxu0 %v421
    %648 = vmatprep.subr.mxu0 %v424
    %649 = vmatpush1.msra.mxu0 %v423
    %650 = vmatprep.subr.mxu0 %v426
    %651 = vmatpush1.msra.mxu0 %v425
    %652 = vmatprep.subr.mxu0 %v428
    %653 = vmatpush1.msra.mxu0 %v427
    %654 = vmatprep.subr.mxu0 %v430
    %655 = vmatpush1.msra.mxu0 %v429
    %656 = vmatprep.subr.mxu0 0.0
    %657 = vmatpush1.msra.mxu0 0.0
    %658 = vmatprep.subr.mxu0 0.0
    %659 = vmatpush1.msra.mxu0 0.0
    %660 = vmatprep.subr.mxu0 0.0
    %661 = vmatpush1.msra.mxu0 0.0
    %662 = vmatprep.subr.mxu0 0.0
    %663 = vmatpush1.msra.mxu0 0.0
    %664 = vmatprep.subr.mxu0 0.0
    %665 = vmatpush1.msra.mxu0 0.0
    %666 = vmatprep.subr.mxu0 0.0
    %667 = vmatpush1.msra.mxu0 0.0
    %668 = vmatprep.subr.mxu0 0.0
    %669 = vmatpush1.msra.mxu0 0.0
    %670 = vmatprep.subr.mxu0 0.0
    %671 = vmatpush1.msra.mxu0 0.0
    %672 = vmatprep.subr.mxu0 0.0
    %673 = vmatpush1.msra.mxu0 0.0
    %674 = vmatprep.subr.mxu0 0.0
    %675 = vmatpush1.msra.mxu0 0.0
    %676 = vmatprep.subr.mxu0 0.0
    %677 = vmatpush1.msra.mxu0 0.0
    %678 = vmatprep.subr.mxu0 0.0
    %679 = vmatpush1.msra.mxu0 0.0
    %680 = vmatprep.subr.mxu0 0.0
    %681 = vmatpush1.msra.mxu0 0.0
    %682 = vmatprep.subr.mxu0 0.0
    %683 = vmatpush1.msra.mxu0 0.0
    %684 = vmatprep.subr.mxu0 0.0
    %685 = vmatpush1.msra.mxu0 0.0
    %686 = vmatprep.subr.mxu0 0.0
    %687 = vmatpush1.msra.mxu0 0.0
    %688 = vmatprep.subr.mxu0 0.0
    %689 = vmatpush1.msra.mxu0 0.0
    %690 = vmatprep.subr.mxu0 0.0
    %691 = vmatpush1.msra.mxu0 0.0
    %692 = vmatprep.subr.mxu0 0.0
    %693 = vmatpush1.msra.mxu0 0.0
    %694 = vmatprep.subr.mxu0 0.0
    %695 = vmatpush1.msra.mxu0 0.0
    %696 = vmatprep.subr.mxu0 0.0
    %697 = vmatpush1.msra.mxu0 0.0
    %698 = vmatprep.subr.mxu0 0.0
    %699 = vmatpush1.msra.mxu0 0.0
    %700 = vmatprep.subr.mxu0 0.0
    %701 = vmatpush1.msra.mxu0 0.0
    %702 = vmatprep.subr.mxu0 0.0
    %703 = vmatpush1.msra.mxu0 0.0
    %704 = vmatprep.mubr.f32.mxu0 0.0
    %705 = vmatmul.mubr.f32.gmra.mrb[0].mxu0 %v638
    %v706 = vpop.f32.mrb[0].mxu0
    %v707 = vadd.f32 0.0, %v706
    %v708 = vpop.f32.mrb[0].mxu0
    %v709 = vadd.f32 0.0, %v708
    %710 = vdwg.mxu0
    %v711 = vadd.f32 %v381, %v707
    %v712 = vxor.u32 %v711, 2147483648
    %v713 = vmul.f32 %v712, 1.442695
    %v714 = vpow.pop %v713
    %v715 = vadd.f32 %v714, 1.0
    %v716 = vrcp.pop %v715
    %v717 = vmul.f32 1.0, %v716
    %v718 = vadd.f32 %v709, %v519
    %v719 = vmul.f32 %v717, %v718
    %v720 = vadd.f32 %v383, %v719
    %v721 = vtanh.pop %v720
    %v722 = vsub.f32 1.0, %v717
    %724 = vrot.lane.b32.xlu0 %v721, 64
    %v725 = vpop.permute.xlu0 %724
    %v727 = vmul.f32 %v722, %v725
    %v728 = vmul.f32 %v717, %v632
    %v729 = vadd.f32 %v727, %v728
    %731 = vrot.lane.b32.xlu0 %v729, 64
    %v732 = vpop.permute.xlu0 %731
    %734 = vst.msk [vmem:[#allocation10 + $0x10] sm:$0xff] %vm433, %v732
    %v735 = vsel %vm433, %v732, 0
    %737 = vmatprep.subr.mxu0 %v416
    %738 = vmatpush1.msra.mxu0 %v415
    %739 = vmatprep.subr.mxu0 %v418
    %740 = vmatpush1.msra.mxu0 %v417
    %741 = vmatprep.subr.mxu0 %v420
    %742 = vmatpush1.msra.mxu0 %v419
    %743 = vmatprep.subr.mxu0 %v422
    %744 = vmatpush1.msra.mxu0 %v421
    %745 = vmatprep.subr.mxu0 %v424
    %746 = vmatpush1.msra.mxu0 %v423
    %747 = vmatprep.subr.mxu0 %v426
    %748 = vmatpush1.msra.mxu0 %v425
    %749 = vmatprep.subr.mxu0 %v428
    %750 = vmatpush1.msra.mxu0 %v427
    %751 = vmatprep.subr.mxu0 %v430
    %752 = vmatpush1.msra.mxu0 %v429
    %753 = vmatprep.subr.mxu0 0.0
    %754 = vmatpush1.msra.mxu0 0.0
    %755 = vmatprep.subr.mxu0 0.0
    %756 = vmatpush1.msra.mxu0 0.0
    %757 = vmatprep.subr.mxu0 0.0
    %758 = vmatpush1.msra.mxu0 0.0
    %759 = vmatprep.subr.mxu0 0.0
    %760 = vmatpush1.msra.mxu0 0.0
    %761 = vmatprep.subr.mxu0 0.0
    %762 = vmatpush1.msra.mxu0 0.0
    %763 = vmatprep.subr.mxu0 0.0
    %764 = vmatpush1.msra.mxu0 0.0
    %765 = vmatprep.subr.mxu0 0.0
    %766 = vmatpush1.msra.mxu0 0.0
    %767 = vmatprep.subr.mxu0 0.0
    %768 = vmatpush1.msra.mxu0 0.0
    %769 = vmatprep.subr.mxu0 0.0
    %770 = vmatpush1.msra.mxu0 0.0
    %771 = vmatprep.subr.mxu0 0.0
    %772 = vmatpush1.msra.mxu0 0.0
    %773 = vmatprep.subr.mxu0 0.0
    %774 = vmatpush1.msra.mxu0 0.0
    %775 = vmatprep.subr.mxu0 0.0
    %776 = vmatpush1.msra.mxu0 0.0
    %777 = vmatprep.subr.mxu0 0.0
    %778 = vmatpush1.msra.mxu0 0.0
    %779 = vmatprep.subr.mxu0 0.0
    %780 = vmatpush1.msra.mxu0 0.0
    %781 = vmatprep.subr.mxu0 0.0
    %782 = vmatpush1.msra.mxu0 0.0
    %783 = vmatprep.subr.mxu0 0.0
    %784 = vmatpush1.msra.mxu0 0.0
    %785 = vmatprep.subr.mxu0 0.0
    %786 = vmatpush1.msra.mxu0 0.0
    %787 = vmatprep.subr.mxu0 0.0
    %788 = vmatpush1.msra.mxu0 0.0
    %789 = vmatprep.subr.mxu0 0.0
    %790 = vmatpush1.msra.mxu0 0.0
    %791 = vmatprep.subr.mxu0 0.0
    %792 = vmatpush1.msra.mxu0 0.0
    %793 = vmatprep.subr.mxu0 0.0
    %794 = vmatpush1.msra.mxu0 0.0
    %795 = vmatprep.subr.mxu0 0.0
    %796 = vmatpush1.msra.mxu0 0.0
    %797 = vmatprep.subr.mxu0 0.0
    %798 = vmatpush1.msra.mxu0 0.0
    %799 = vmatprep.subr.mxu0 0.0
    %800 = vmatpush1.msra.mxu0 0.0
    %801 = vmatprep.mubr.f32.mxu0 0.0
    %802 = vmatmul.mubr.f32.gmra.mrb[0].mxu0 %v735
    %v803 = vpop.f32.mrb[0].mxu0
    %v804 = vadd.f32 0.0, %v803
    %v805 = vpop.f32.mrb[0].mxu0
    %v806 = vadd.f32 0.0, %v805
    %807 = vdwg.mxu0
    %v808 = vadd.f32 %v387, %v804
    %v809 = vxor.u32 %v808, 2147483648
    %v810 = vmul.f32 %v809, 1.442695
    %v811 = vpow.pop %v810
    %v812 = vadd.f32 %v811, 1.0
    %v813 = vrcp.pop %v812
    %v814 = vmul.f32 1.0, %v813
    %v815 = vadd.f32 %v806, %v519
    %v816 = vmul.f32 %v814, %v815
    %v817 = vadd.f32 %v389, %v816
    %v818 = vtanh.pop %v817
    %v819 = vsub.f32 1.0, %v814
    %821 = vrot.lane.b32.xlu0 %v818, 64
    %v822 = vpop.permute.xlu0 %821
    %v824 = vmul.f32 %v819, %v822
    %v825 = vmul.f32 %v814, %v729
    %v826 = vadd.f32 %v824, %v825
    %828 = vrot.lane.b32.xlu0 %v826, 64
    %v829 = vpop.permute.xlu0 %828
    %831 = vst.msk [vmem:[#allocation10 + $0x18] sm:$0xff] %vm433, %v829
    %v832 = vsel %vm433, %v829, 0
    %834 = vmatprep.subr.mxu0 %v416
    %835 = vmatpush1.msra.mxu0 %v415
    %836 = vmatprep.subr.mxu0 %v418
    %837 = vmatpush1.msra.mxu0 %v417
    %838 = vmatprep.subr.mxu0 %v420
    %839 = vmatpush1.msra.mxu0 %v419
    %840 = vmatprep.subr.mxu0 %v422
    %841 = vmatpush1.msra.mxu0 %v421
    %842 = vmatprep.subr.mxu0 %v424
    %843 = vmatpush1.msra.mxu0 %v423
    %844 = vmatprep.subr.mxu0 %v426
    %845 = vmatpush1.msra.mxu0 %v425
    %846 = vmatprep.subr.mxu0 %v428
    %847 = vmatpush1.msra.mxu0 %v427
    %848 = vmatprep.subr.mxu0 %v430
    %849 = vmatpush1.msra.mxu0 %v429
    %850 = vmatprep.subr.mxu0 0.0
    %851 = vmatpush1.msra.mxu0 0.0
    %852 = vmatprep.subr.mxu0 0.0
    %853 = vmatpush1.msra.mxu0 0.0
    %854 = vmatprep.subr.mxu0 0.0
    %855 = vmatpush1.msra.mxu0 0.0
    %856 = vmatprep.subr.mxu0 0.0
    %857 = vmatpush1.msra.mxu0 0.0
    %858 = vmatprep.subr.mxu0 0.0
    %859 = vmatpush1.msra.mxu0 0.0
    %860 = vmatprep.subr.mxu0 0.0
    %861 = vmatpush1.msra.mxu0 0.0
    %862 = vmatprep.subr.mxu0 0.0
    %863 = vmatpush1.msra.mxu0 0.0
    %864 = vmatprep.subr.mxu0 0.0
    %865 = vmatpush1.msra.mxu0 0.0
    %866 = vmatprep.subr.mxu0 0.0
    %867 = vmatpush1.msra.mxu0 0.0
    %868 = vmatprep.subr.mxu0 0.0
    %869 = vmatpush1.msra.mxu0 0.0
    %870 = vmatprep.subr.mxu0 0.0
    %871 = vmatpush1.msra.mxu0 0.0
    %872 = vmatprep.subr.mxu0 0.0
    %873 = vmatpush1.msra.mxu0 0.0
    %874 = vmatprep.subr.mxu0 0.0
    %875 = vmatpush1.msra.mxu0 0.0
    %876 = vmatprep.subr.mxu0 0.0
    %877 = vmatpush1.msra.mxu0 0.0
    %878 = vmatprep.subr.mxu0 0.0
    %879 = vmatpush1.msra.mxu0 0.0
    %880 = vmatprep.subr.mxu0 0.0
    %881 = vmatpush1.msra.mxu0 0.0
    %882 = vmatprep.subr.mxu0 0.0
    %883 = vmatpush1.msra.mxu0 0.0
    %884 = vmatprep.subr.mxu0 0.0
    %885 = vmatpush1.msra.mxu0 0.0
    %886 = vmatprep.subr.mxu0 0.0
    %887 = vmatpush1.msra.mxu0 0.0
    %888 = vmatprep.subr.mxu0 0.0
    %889 = vmatpush1.msra.mxu0 0.0
    %890 = vmatprep.subr.mxu0 0.0
    %891 = vmatpush1.msra.mxu0 0.0
    %892 = vmatprep.subr.mxu0 0.0
    %893 = vmatpush1.msra.mxu0 0.0
    %894 = vmatprep.subr.mxu0 0.0
    %895 = vmatpush1.msra.mxu0 0.0
    %896 = vmatprep.subr.mxu0 0.0
    %897 = vmatpush1.msra.mxu0 0.0
    %898 = vmatprep.mubr.f32.mxu0 0.0
    %899 = vmatmul.mubr.f32.gmra.mrb[0].mxu0 %v832
    %v900 = vpop.f32.mrb[0].mxu0
    %v901 = vadd.f32 0.0, %v900
    %v902 = vpop.f32.mrb[0].mxu0
    %v903 = vadd.f32 0.0, %v902
    %904 = vdwg.mxu0
    %v905 = vadd.f32 %v393, %v901
    %v906 = vxor.u32 %v905, 2147483648
    %v907 = vmul.f32 %v906, 1.442695
    %v908 = vpow.pop %v907
    %v909 = vadd.f32 %v908, 1.0
    %v910 = vrcp.pop %v909
    %v911 = vmul.f32 1.0, %v910
    %v912 = vadd.f32 %v903, %v519
    %v913 = vmul.f32 %v911, %v912
    %v914 = vadd.f32 %v395, %v913
    %v915 = vtanh.pop %v914
    %v916 = vsub.f32 1.0, %v911
    %918 = vrot.lane.b32.xlu0 %v915, 64
    %v919 = vpop.permute.xlu0 %918
    %v921 = vmul.f32 %v916, %v919
    %v922 = vmul.f32 %v911, %v826
    %v923 = vadd.f32 %v921, %v922
    %925 = vrot.lane.b32.xlu0 %v923, 64
    %v926 = vpop.permute.xlu0 %925
    %928 = vst.msk [vmem:[#allocation10 + $0x20] sm:$0xff] %vm433, %v926
    %v929 = vsel %vm433, %v926, 0
    %931 = vmatprep.subr.mxu0 %v416
    %932 = vmatpush1.msra.mxu0 %v415
    %933 = vmatprep.subr.mxu0 %v418
    %934 = vmatpush1.msra.mxu0 %v417
    %935 = vmatprep.subr.mxu0 %v420
    %936 = vmatpush1.msra.mxu0 %v419
    %937 = vmatprep.subr.mxu0 %v422
    %938 = vmatpush1.msra.mxu0 %v421
    %939 = vmatprep.subr.mxu0 %v424
    %940 = vmatpush1.msra.mxu0 %v423
    %941 = vmatprep.subr.mxu0 %v426
    %942 = vmatpush1.msra.mxu0 %v425
    %943 = vmatprep.subr.mxu0 %v428
    %944 = vmatpush1.msra.mxu0 %v427
    %945 = vmatprep.subr.mxu0 %v430
    %946 = vmatpush1.msra.mxu0 %v429
    %947 = vmatprep.subr.mxu0 0.0
    %948 = vmatpush1.msra.mxu0 0.0
    %949 = vmatprep.subr.mxu0 0.0
    %950 = vmatpush1.msra.mxu0 0.0
    %951 = vmatprep.subr.mxu0 0.0
    %952 = vmatpush1.msra.mxu0 0.0
    %953 = vmatprep.subr.mxu0 0.0
    %954 = vmatpush1.msra.mxu0 0.0
    %955 = vmatprep.subr.mxu0 0.0
    %956 = vmatpush1.msra.mxu0 0.0
    %957 = vmatprep.subr.mxu0 0.0
    %958 = vmatpush1.msra.mxu0 0.0
    %959 = vmatprep.subr.mxu0 0.0
    %960 = vmatpush1.msra.mxu0 0.0
    %961 = vmatprep.subr.mxu0 0.0
    %962 = vmatpush1.msra.mxu0 0.0
    %963 = vmatprep.subr.mxu0 0.0
    %964 = vmatpush1.msra.mxu0 0.0
    %965 = vmatprep.subr.mxu0 0.0
    %966 = vmatpush1.msra.mxu0 0.0
    %967 = vmatprep.subr.mxu0 0.0
    %968 = vmatpush1.msra.mxu0 0.0
    %969 = vmatprep.subr.mxu0 0.0
    %970 = vmatpush1.msra.mxu0 0.0
    %971 = vmatprep.subr.mxu0 0.0
    %972 = vmatpush1.msra.mxu0 0.0
    %973 = vmatprep.subr.mxu0 0.0
    %974 = vmatpush1.msra.mxu0 0.0
    %975 = vmatprep.subr.mxu0 0.0
    %976 = vmatpush1.msra.mxu0 0.0
    %977 = vmatprep.subr.mxu0 0.0
    %978 = vmatpush1.msra.mxu0 0.0
    %979 = vmatprep.subr.mxu0 0.0
    %980 = vmatpush1.msra.mxu0 0.0
    %981 = vmatprep.subr.mxu0 0.0
    %982 = vmatpush1.msra.mxu0 0.0
    %983 = vmatprep.subr.mxu0 0.0
    %984 = vmatpush1.msra.mxu0 0.0
    %985 = vmatprep.subr.mxu0 0.0
    %986 = vmatpush1.msra.mxu0 0.0
    %987 = vmatprep.subr.mxu0 0.0
    %988 = vmatpush1.msra.mxu0 0.0
    %989 = vmatprep.subr.mxu0 0.0
    %990 = vmatpush1.msra.mxu0 0.0
    %991 = vmatprep.subr.mxu0 0.0
    %992 = vmatpush1.msra.mxu0 0.0
    %993 = vmatprep.subr.mxu0 0.0
    %994 = vmatpush1.msra.mxu0 0.0
    %995 = vmatprep.mubr.f32.mxu0 0.0
    %996 = vmatmul.mubr.f32.gmra.mrb[0].mxu0 %v929
    %v997 = vpop.f32.mrb[0].mxu0
    %v998 = vadd.f32 0.0, %v997
    %v999 = vpop.f32.mrb[0].mxu0
    %v1000 = vadd.f32 0.0, %v999
    %1001 = vdwg.mxu0
    %v1002 = vadd.f32 %v399, %v998
    %v1003 = vxor.u32 %v1002, 2147483648
    %v1004 = vmul.f32 %v1003, 1.442695
    %v1005 = vpow.pop %v1004
    %v1006 = vadd.f32 %v1005, 1.0
    %v1007 = vrcp.pop %v1006
    %v1008 = vmul.f32 1.0, %v1007
    %v1009 = vadd.f32 %v1000, %v519
    %v1010 = vmul.f32 %v1008, %v1009
    %v1011 = vadd.f32 %v401, %v1010
    %v1012 = vtanh.pop %v1011
    %v1013 = vsub.f32 1.0, %v1008
    %1015 = vrot.lane.b32.xlu0 %v1012, 64
    %v1016 = vpop.permute.xlu0 %1015
    %v1018 = vmul.f32 %v1013, %v1016
    %v1019 = vmul.f32 %v1008, %v923
    %v1020 = vadd.f32 %v1018, %v1019
    %1022 = vrot.lane.b32.xlu0 %v1020, 64
    %v1023 = vpop.permute.xlu0 %1022
    %1025 = vst.msk [vmem:[#allocation10 + $0x28] sm:$0xff] %vm433, %v1023
    %v1026 = vsel %vm433, %v1023, 0
    %1028 = vmatprep.subr.mxu0 %v416
    %1029 = vmatpush1.msra.mxu0 %v415
    %1030 = vmatprep.subr.mxu0 %v418
    %1031 = vmatpush1.msra.mxu0 %v417
    %1032 = vmatprep.subr.mxu0 %v420
    %1033 = vmatpush1.msra.mxu0 %v419
    %1034 = vmatprep.subr.mxu0 %v422
    %1035 = vmatpush1.msra.mxu0 %v421
    %1036 = vmatprep.subr.mxu0 %v424
    %1037 = vmatpush1.msra.mxu0 %v423
    %1038 = vmatprep.subr.mxu0 %v426
    %1039 = vmatpush1.msra.mxu0 %v425
    %1040 = vmatprep.subr.mxu0 %v428
    %1041 = vmatpush1.msra.mxu0 %v427
    %1042 = vmatprep.subr.mxu0 %v430
    %1043 = vmatpush1.msra.mxu0 %v429
    %1044 = vmatprep.subr.mxu0 0.0
    %1045 = vmatpush1.msra.mxu0 0.0
    %1046 = vmatprep.subr.mxu0 0.0
    %1047 = vmatpush1.msra.mxu0 0.0
    %1048 = vmatprep.subr.mxu0 0.0
    %1049 = vmatpush1.msra.mxu0 0.0
    %1050 = vmatprep.subr.mxu0 0.0
    %1051 = vmatpush1.msra.mxu0 0.0
    %1052 = vmatprep.subr.mxu0 0.0
    %1053 = vmatpush1.msra.mxu0 0.0
    %1054 = vmatprep.subr.mxu0 0.0
    %1055 = vmatpush1.msra.mxu0 0.0
    %1056 = vmatprep.subr.mxu0 0.0
    %1057 = vmatpush1.msra.mxu0 0.0
    %1058 = vmatprep.subr.mxu0 0.0
    %1059 = vmatpush1.msra.mxu0 0.0
    %1060 = vmatprep.subr.mxu0 0.0
    %1061 = vmatpush1.msra.mxu0 0.0
    %1062 = vmatprep.subr.mxu0 0.0
    %1063 = vmatpush1.msra.mxu0 0.0
    %1064 = vmatprep.subr.mxu0 0.0
    %1065 = vmatpush1.msra.mxu0 0.0
    %1066 = vmatprep.subr.mxu0 0.0
    %1067 = vmatpush1.msra.mxu0 0.0
    %1068 = vmatprep.subr.mxu0 0.0
    %1069 = vmatpush1.msra.mxu0 0.0
    %1070 = vmatprep.subr.mxu0 0.0
    %1071 = vmatpush1.msra.mxu0 0.0
    %1072 = vmatprep.subr.mxu0 0.0
    %1073 = vmatpush1.msra.mxu0 0.0
    %1074 = vmatprep.subr.mxu0 0.0
    %1075 = vmatpush1.msra.mxu0 0.0
    %1076 = vmatprep.subr.mxu0 0.0
    %1077 = vmatpush1.msra.mxu0 0.0
    %1078 = vmatprep.subr.mxu0 0.0
    %1079 = vmatpush1.msra.mxu0 0.0
    %1080 = vmatprep.subr.mxu0 0.0
    %1081 = vmatpush1.msra.mxu0 0.0
    %1082 = vmatprep.subr.mxu0 0.0
    %1083 = vmatpush1.msra.mxu0 0.0
    %1084 = vmatprep.subr.mxu0 0.0
    %1085 = vmatpush1.msra.mxu0 0.0
    %1086 = vmatprep.subr.mxu0 0.0
    %1087 = vmatpush1.msra.mxu0 0.0
    %1088 = vmatprep.subr.mxu0 0.0
    %1089 = vmatpush1.msra.mxu0 0.0
    %1090 = vmatprep.subr.mxu0 0.0
    %1091 = vmatpush1.msra.mxu0 0.0
    %1092 = vmatprep.mubr.f32.mxu0 0.0
    %1093 = vmatmul.mubr.f32.gmra.mrb[0].mxu0 %v1026
    %v1094 = vpop.f32.mrb[0].mxu0
    %v1095 = vadd.f32 0.0, %v1094
    %v1096 = vpop.f32.mrb[0].mxu0
    %v1097 = vadd.f32 0.0, %v1096
    %1098 = vdwg.mxu0
    %v1099 = vadd.f32 %v405, %v1095
    %v1100 = vxor.u32 %v1099, 2147483648
    %v1101 = vmul.f32 %v1100, 1.442695
    %v1102 = vpow.pop %v1101
    %v1103 = vadd.f32 %v1102, 1.0
    %v1104 = vrcp.pop %v1103
    %v1105 = vmul.f32 1.0, %v1104
    %v1106 = vadd.f32 %v1097, %v519
    %v1107 = vmul.f32 %v1105, %v1106
    %v1108 = vadd.f32 %v407, %v1107
    %v1109 = vtanh.pop %v1108
    %v1110 = vsub.f32 1.0, %v1105
    %1112 = vrot.lane.b32.xlu0 %v1109, 64
    %v1113 = vpop.permute.xlu0 %1112
    %v1115 = vmul.f32 %v1110, %v1113
    %v1116 = vmul.f32 %v1105, %v1020
    %v1117 = vadd.f32 %v1115, %v1116
    %1119 = vrot.lane.b32.xlu0 %v1117, 64
    %v1120 = vpop.permute.xlu0 %1119
    %1122 = vst.msk [vmem:[#allocation10 + $0x30] sm:$0xff] %vm433, %v1120
    %v1123 = vsel %vm433, %v1120, 0
    %1125 = vmatprep.subr.mxu0 %v416
    %1126 = vmatpush1.msra.mxu0 %v415
    %1127 = vmatprep.subr.mxu0 %v418
    %1128 = vmatpush1.msra.mxu0 %v417
    %1129 = vmatprep.subr.mxu0 %v420
    %1130 = vmatpush1.msra.mxu0 %v419
    %1131 = vmatprep.subr.mxu0 %v422
    %1132 = vmatpush1.msra.mxu0 %v421
    %1133 = vmatprep.subr.mxu0 %v424
    %1134 = vmatpush1.msra.mxu0 %v423
    %1135 = vmatprep.subr.mxu0 %v426
    %1136 = vmatpush1.msra.mxu0 %v425
    %1137 = vmatprep.subr.mxu0 %v428
    %1138 = vmatpush1.msra.mxu0 %v427
    %1139 = vmatprep.subr.mxu0 %v430
    %1140 = vmatpush1.msra.mxu0 %v429
    %1141 = vmatprep.subr.mxu0 0.0
    %1142 = vmatpush1.msra.mxu0 0.0
    %1143 = vmatprep.subr.mxu0 0.0
    %1144 = vmatpush1.msra.mxu0 0.0
    %1145 = vmatprep.subr.mxu0 0.0
    %1146 = vmatpush1.msra.mxu0 0.0
    %1147 = vmatprep.subr.mxu0 0.0
    %1148 = vmatpush1.msra.mxu0 0.0
    %1149 = vmatprep.subr.mxu0 0.0
    %1150 = vmatpush1.msra.mxu0 0.0
    %1151 = vmatprep.subr.mxu0 0.0
    %1152 = vmatpush1.msra.mxu0 0.0
    %1153 = vmatprep.subr.mxu0 0.0
    %1154 = vmatpush1.msra.mxu0 0.0
    %1155 = vmatprep.subr.mxu0 0.0
    %1156 = vmatpush1.msra.mxu0 0.0
    %1157 = vmatprep.subr.mxu0 0.0
    %1158 = vmatpush1.msra.mxu0 0.0
    %1159 = vmatprep.subr.mxu0 0.0
    %1160 = vmatpush1.msra.mxu0 0.0
    %1161 = vmatprep.subr.mxu0 0.0
    %1162 = vmatpush1.msra.mxu0 0.0
    %1163 = vmatprep.subr.mxu0 0.0
    %1164 = vmatpush1.msra.mxu0 0.0
    %1165 = vmatprep.subr.mxu0 0.0
    %1166 = vmatpush1.msra.mxu0 0.0
    %1167 = vmatprep.subr.mxu0 0.0
    %1168 = vmatpush1.msra.mxu0 0.0
    %1169 = vmatprep.subr.mxu0 0.0
    %1170 = vmatpush1.msra.mxu0 0.0
    %1171 = vmatprep.subr.mxu0 0.0
    %1172 = vmatpush1.msra.mxu0 0.0
    %1173 = vmatprep.subr.mxu0 0.0
    %1174 = vmatpush1.msra.mxu0 0.0
    %1175 = vmatprep.subr.mxu0 0.0
    %1176 = vmatpush1.msra.mxu0 0.0
    %1177 = vmatprep.subr.mxu0 0.0
    %1178 = vmatpush1.msra.mxu0 0.0
    %1179 = vmatprep.subr.mxu0 0.0
    %1180 = vmatpush1.msra.mxu0 0.0
    %1181 = vmatprep.subr.mxu0 0.0
    %1182 = vmatpush1.msra.mxu0 0.0
    %1183 = vmatprep.subr.mxu0 0.0
    %1184 = vmatpush1.msra.mxu0 0.0
    %1185 = vmatprep.subr.mxu0 0.0
    %1186 = vmatpush1.msra.mxu0 0.0
    %1187 = vmatprep.subr.mxu0 0.0
    %1188 = vmatpush1.msra.mxu0 0.0
    %1189 = vmatprep.mubr.f32.mxu0 0.0
    %1190 = vmatmul.mubr.f32.gmra.mrb[0].mxu0 %v1123
    %v1191 = vpop.f32.mrb[0].mxu0
    %v1192 = vadd.f32 0.0, %v1191
    %v1193 = vpop.f32.mrb[0].mxu0
    %v1194 = vadd.f32 0.0, %v1193
    %1195 = vdwg.mxu0
    %v1196 = vadd.f32 %v411, %v1192
    %v1197 = vxor.u32 %v1196, 2147483648
    %v1198 = vmul.f32 %v1197, 1.442695
    %v1199 = vpow.pop %v1198
    %v1200 = vadd.f32 %v1199, 1.0
    %v1201 = vrcp.pop %v1200
    %v1202 = vmul.f32 1.0, %v1201
    %v1203 = vadd.f32 %v1194, %v519
    %v1204 = vmul.f32 %v1202, %v1203
    %v1205 = vadd.f32 %v413, %v1204
    %v1206 = vtanh.pop %v1205
    %v1207 = vsub.f32 1.0, %v1202
    %1209 = vrot.lane.b32.xlu0 %v1206, 64
    %v1210 = vpop.permute.xlu0 %1209
    %v1212 = vmul.f32 %v1207, %v1210
    %v1213 = vmul.f32 %v1202, %v1117
    %v1214 = vadd.f32 %v1212, %v1213
    %1216 = vrot.lane.b32.xlu0 %v1214, 64
    %v1217 = vpop.permute.xlu0 %1216
    %1219 = vst.msk [vmem:[#allocation10 + $0x38] sm:$0xff] %vm433, %v1217
    %v1220 = vld [vmem:[#allocation10] sm:$0xff]
    %v1221 = vld [vmem:[#allocation10 + $0x8] sm:$0xff]
    %v1222 = vld [vmem:[#allocation10 + $0x10] sm:$0xff]
    %v1223 = vld [vmem:[#allocation10 + $0x18] sm:$0xff]
    %v1224 = vld [vmem:[#allocation10 + $0x20] sm:$0xff]
    %v1225 = vld [vmem:[#allocation10 + $0x28] sm:$0xff]
    %v1226 = vld [vmem:[#allocation10 + $0x30] sm:$0xff]
    %v1227 = vld [vmem:[#allocation10 + $0x38] sm:$0xff]
    %v1228 = vld [vmem:[%s9] sm:$0xff]
    %v1229 = vld [vmem:[%s9 + $0x8] sm:$0xff]
    %v1230 = vld [vmem:[%s9 + $0x10] sm:$0xff]
    %v1231 = vld [vmem:[%s9 + $0x18] sm:$0xff]
    %v1232 = vld [vmem:[%s9 + $0x20] sm:$0xff]
    %v1233 = vld [vmem:[%s9 + $0x28] sm:$0xff]
    %v1234 = vld [vmem:[%s9 + $0x30] sm:$0xff]
    %v1235 = vld [vmem:[%s9 + $0x38] sm:$0xff]
    %v1236 = vld [vmem:[%s10] sm:$0x1]
    %v1238 = vlaneseq
    %v1239 = vshrl.u32 %v1238, 7
    %v1240 = vsub.s32 0, %v1239
    %v1241 = vrot.slane %v1236, %v1240
    %v1244 = vsel %vm433, %v1220, 0
    %v1247 = vsel %vm433, %v1221, 0
    %v1250 = vsel %vm433, %v1222, 0
    %v1253 = vsel %vm433, %v1223, 0
    %v1256 = vsel %vm433, %v1224, 0
    %v1259 = vsel %vm433, %v1225, 0
    %v1262 = vsel %vm433, %v1226, 0
    %v1265 = vsel %vm433, %v1227, 0
    %1267 = vmatprep.subr.mxu0 0.0
    %1268 = vmatpush1.msra.mxu0 %v1228
    %1269 = vmatprep.subr.mxu0 0.0
    %1270 = vmatpush1.msra.mxu0 %v1229
    %1271 = vmatprep.subr.mxu0 0.0
    %1272 = vmatpush1.msra.mxu0 %v1230
    %1273 = vmatprep.subr.mxu0 0.0
    %1274 = vmatpush1.msra.mxu0 %v1231
    %1275 = vmatprep.subr.mxu0 0.0
    %1276 = vmatpush1.msra.mxu0 %v1232
    %1277 = vmatprep.subr.mxu0 0.0
    %1278 = vmatpush1.msra.mxu0 %v1233
    %1279 = vmatprep.subr.mxu0 0.0
    %1280 = vmatpush1.msra.mxu0 %v1234
    %1281 = vmatprep.subr.mxu0 0.0
    %1282 = vmatpush1.msra.mxu0 %v1235
    %1283 = vmatprep.subr.mxu0 0.0
    %1284 = vmatpush1.msra.mxu0 0.0
    %1285 = vmatprep.subr.mxu0 0.0
    %1286 = vmatpush1.msra.mxu0 0.0
    %1287 = vmatprep.subr.mxu0 0.0
    %1288 = vmatpush1.msra.mxu0 0.0
    %1289 = vmatprep.subr.mxu0 0.0
    %1290 = vmatpush1.msra.mxu0 0.0
    %1291 = vmatprep.subr.mxu0 0.0
    %1292 = vmatpush1.msra.mxu0 0.0
    %1293 = vmatprep.subr.mxu0 0.0
    %1294 = vmatpush1.msra.mxu0 0.0
    %1295 = vmatprep.subr.mxu0 0.0
    %1296 = vmatpush1.msra.mxu0 0.0
    %1297 = vmatprep.subr.mxu0 0.0
    %1298 = vmatpush1.msra.mxu0 0.0
    %1299 = vmatprep.subr.mxu0 0.0
    %1300 = vmatpush1.msra.mxu0 0.0
    %1301 = vmatprep.subr.mxu0 0.0
    %1302 = vmatpush1.msra.mxu0 0.0
    %1303 = vmatprep.subr.mxu0 0.0
    %1304 = vmatpush1.msra.mxu0 0.0
    %1305 = vmatprep.subr.mxu0 0.0
    %1306 = vmatpush1.msra.mxu0 0.0
    %1307 = vmatprep.subr.mxu0 0.0
    %1308 = vmatpush1.msra.mxu0 0.0
    %1309 = vmatprep.subr.mxu0 0.0
    %1310 = vmatpush1.msra.mxu0 0.0
    %1311 = vmatprep.subr.mxu0 0.0
    %1312 = vmatpush1.msra.mxu0 0.0
    %1313 = vmatprep.subr.mxu0 0.0
    %1314 = vmatpush1.msra.mxu0 0.0
    %1315 = vmatprep.subr.mxu0 0.0
    %1316 = vmatpush1.msra.mxu0 0.0
    %1317 = vmatprep.subr.mxu0 0.0
    %1318 = vmatpush1.msra.mxu0 0.0
    %1319 = vmatprep.subr.mxu0 0.0
    %1320 = vmatpush1.msra.mxu0 0.0
    %1321 = vmatprep.subr.mxu0 0.0
    %1322 = vmatpush1.msra.mxu0 0.0
    %1323 = vmatprep.subr.mxu0 0.0
    %1324 = vmatpush1.msra.mxu0 0.0
    %1325 = vmatprep.subr.mxu0 0.0
    %1326 = vmatpush1.msra.mxu0 0.0
    %1327 = vmatprep.subr.mxu0 0.0
    %1328 = vmatpush1.msra.mxu0 0.0
    %1329 = vmatprep.subr.mxu0 0.0
    %1330 = vmatpush1.msra.mxu0 0.0
    %1331 = vmatprep.mubr.f32.mxu0 0.0
    %1332 = vmatmul.mubr.f32.gmra.mrb[0].mxu0 %v1244
    %v1333 = vpop.f32.mrb[0].mxu0
    %v1334 = vadd.f32 %v1241, %v1333
    %v1335 = vpop.f32.mrb[0].mxu0
    %1336 = vmatprep.mubr.f32.mxu0 0.0
    %1337 = vmatmul.mubr.f32.gmra.mrb[0].mxu0 %v1247
    %v1338 = vpop.f32.mrb[0].mxu0
    %v1339 = vadd.f32 %v1241, %v1338
    %v1340 = vpop.f32.mrb[0].mxu0
    %1341 = vmatprep.mubr.f32.mxu0 0.0
    %1342 = vmatmul.mubr.f32.gmra.mrb[0].mxu0 %v1250
    %v1343 = vpop.f32.mrb[0].mxu0
    %v1344 = vadd.f32 %v1241, %v1343
    %v1345 = vpop.f32.mrb[0].mxu0
    %1346 = vmatprep.mubr.f32.mxu0 0.0
    %1347 = vmatmul.mubr.f32.gmra.mrb[0].mxu0 %v1253
    %v1348 = vpop.f32.mrb[0].mxu0
    %v1349 = vadd.f32 %v1241, %v1348
    %v1350 = vpop.f32.mrb[0].mxu0
    %1351 = vmatprep.mubr.f32.mxu0 0.0
    %1352 = vmatmul.mubr.f32.gmra.mrb[0].mxu0 %v1256
    %v1353 = vpop.f32.mrb[0].mxu0
    %v1354 = vadd.f32 %v1241, %v1353
    %v1355 = vpop.f32.mrb[0].mxu0
    %1356 = vmatprep.mubr.f32.mxu0 0.0
    %1357 = vmatmul.mubr.f32.gmra.mrb[0].mxu0 %v1259
    %v1358 = vpop.f32.mrb[0].mxu0
    %v1359 = vadd.f32 %v1241, %v1358
    %v1360 = vpop.f32.mrb[0].mxu0
    %1361 = vmatprep.mubr.f32.mxu0 0.0
    %1362 = vmatmul.mubr.f32.gmra.mrb[0].mxu0 %v1262
    %v1363 = vpop.f32.mrb[0].mxu0
    %v1364 = vadd.f32 %v1241, %v1363
    %v1365 = vpop.f32.mrb[0].mxu0
    %1366 = vmatprep.mubr.f32.mxu0 0.0
    %1367 = vmatmul.mubr.f32.gmra.mrb[0].mxu0 %v1265
    %v1368 = vpop.f32.mrb[0].mxu0
    %v1369 = vadd.f32 %v1241, %v1368
    %v1370 = vpop.f32.mrb[0].mxu0
    %1371 = vdwg.mxu0
    %vm1372 = vcmask 261120
    %1373 = vst.msk [vmem:[%s13] sm:$0xff] %vm1372, %v1334
    %1374 = vst.msk [vmem:[%s13 + $0x8] sm:$0xff] %vm1372, %v1339
    %1375 = vst.msk [vmem:[%s13 + $0x10] sm:$0xff] %vm1372, %v1344
    %1376 = vst.msk [vmem:[%s13 + $0x18] sm:$0xff] %vm1372, %v1349
    %1377 = vst.msk [vmem:[%s13 + $0x20] sm:$0xff] %vm1372, %v1354
    %1378 = vst.msk [vmem:[%s13 + $0x28] sm:$0xff] %vm1372, %v1359
    %1379 = vst.msk [vmem:[%s13 + $0x30] sm:$0xff] %vm1372, %v1364
    %1380 = vst.msk [vmem:[%s13 + $0x38] sm:$0xff] %vm1372, %v1369
    %1389 = vrot.lane.b32.xlu0 %v1334, 96
    %v1390 = vpop.permute.xlu0 %1389
    %1391 = vrot.lane.b32.xlu0 %v1339, 96
    %v1392 = vpop.permute.xlu0 %1391
    %1393 = vrot.lane.b32.xlu0 %v1344, 96
    %v1394 = vpop.permute.xlu0 %1393
    %1395 = vrot.lane.b32.xlu0 %v1349, 96
    %v1396 = vpop.permute.xlu0 %1395
    %1397 = vrot.lane.b32.xlu0 %v1354, 96
    %v1398 = vpop.permute.xlu0 %1397
    %1399 = vrot.lane.b32.xlu0 %v1359, 96
    %v1400 = vpop.permute.xlu0 %1399
    %1401 = vrot.lane.b32.xlu0 %v1364, 96
    %v1402 = vpop.permute.xlu0 %1401
    %1403 = vrot.lane.b32.xlu0 %v1369, 96
    %v1404 = vpop.permute.xlu0 %1403
    %1413 = vst.msk [vmem:[%s14] sm:$0xff] %vm1372, %v1390
    %1414 = vst.msk [vmem:[%s14 + $0x8] sm:$0xff] %vm1372, %v1392
    %1415 = vst.msk [vmem:[%s14 + $0x10] sm:$0xff] %vm1372, %v1394
    %1416 = vst.msk [vmem:[%s14 + $0x18] sm:$0xff] %vm1372, %v1396
    %1417 = vst.msk [vmem:[%s14 + $0x20] sm:$0xff] %vm1372, %v1398
    %1418 = vst.msk [vmem:[%s14 + $0x28] sm:$0xff] %vm1372, %v1400
    %1419 = vst.msk [vmem:[%s14 + $0x30] sm:$0xff] %vm1372, %v1402
    %1420 = vst.msk [vmem:[%s14 + $0x38] sm:$0xff] %vm1372, %v1404
    %v1421 = vld [vmem:[%s2] sm:$0xff]
    %v1422 = vld [vmem:[%s2 + $0x8] sm:$0xff]
    %v1423 = vld [vmem:[%s2 + $0x10] sm:$0xff]
    %v1424 = vld [vmem:[%s2 + $0x18] sm:$0xff]
    %v1425 = vld [vmem:[%s2 + $0x20] sm:$0xff]
    %v1426 = vld [vmem:[%s2 + $0x28] sm:$0xff]
    %v1427 = vld [vmem:[%s2 + $0x30] sm:$0xff]
    %v1428 = vld [vmem:[%s2 + $0x38] sm:$0xff]
    %v1429 = vmul.f32 %v1334, 0.5
    %v1430 = vmul.f32 %v1339, 0.5
    %v1431 = vmul.f32 %v1344, 0.5
    %v1432 = vmul.f32 %v1349, 0.5
    %v1433 = vmul.f32 %v1354, 0.5
    %v1434 = vmul.f32 %v1359, 0.5
    %v1435 = vmul.f32 %v1364, 0.5
    %v1436 = vmul.f32 %v1369, 0.5
    %v1437 = vmul.f32 %v1429, 1.442695
    %v1438 = vpow.pop %v1437
    %v1439 = vmul.f32 %v1430, 1.442695
    %v1440 = vpow.pop %v1439
    %v1441 = vmul.f32 %v1431, 1.442695
    %v1442 = vpow.pop %v1441
    %v1443 = vmul.f32 %v1432, 1.442695
    %v1444 = vpow.pop %v1443
    %v1445 = vmul.f32 %v1433, 1.442695
    %v1446 = vpow.pop %v1445
    %v1447 = vmul.f32 %v1434, 1.442695
    %v1448 = vpow.pop %v1447
    %v1449 = vmul.f32 %v1435, 1.442695
    %v1450 = vpow.pop %v1449
    %v1451 = vmul.f32 %v1436, 1.442695
    %v1452 = vpow.pop %v1451
    %1461 = vrot.lane.b32.xlu0 %v1438, 96
    %v1462 = vpop.permute.xlu0 %1461
    %1463 = vrot.lane.b32.xlu0 %v1440, 96
    %v1464 = vpop.permute.xlu0 %1463
    %1465 = vrot.lane.b32.xlu0 %v1442, 96
    %v1466 = vpop.permute.xlu0 %1465
    %1467 = vrot.lane.b32.xlu0 %v1444, 96
    %v1468 = vpop.permute.xlu0 %1467
    %1469 = vrot.lane.b32.xlu0 %v1446, 96
    %v1470 = vpop.permute.xlu0 %1469
    %1471 = vrot.lane.b32.xlu0 %v1448, 96
    %v1472 = vpop.permute.xlu0 %1471
    %1473 = vrot.lane.b32.xlu0 %v1450, 96
    %v1474 = vpop.permute.xlu0 %1473
    %1475 = vrot.lane.b32.xlu0 %v1452, 96
    %v1476 = vpop.permute.xlu0 %1475
    %v1485 = vmul.f32 %v1421, %v1462
    %v1486 = vmul.f32 %v1422, %v1464
    %v1487 = vmul.f32 %v1423, %v1466
    %v1488 = vmul.f32 %v1424, %v1468
    %v1489 = vmul.f32 %v1425, %v1470
    %v1490 = vmul.f32 %v1426, %v1472
    %v1491 = vmul.f32 %v1427, %v1474
    %v1492 = vmul.f32 %v1428, %v1476
    %v1493 = vadd.f32 %v1334, %v1485
    %v1494 = vadd.f32 %v1339, %v1486
    %v1495 = vadd.f32 %v1344, %v1487
    %v1496 = vadd.f32 %v1349, %v1488
    %v1497 = vadd.f32 %v1354, %v1489
    %v1498 = vadd.f32 %v1359, %v1490
    %v1499 = vadd.f32 %v1364, %v1491
    %v1500 = vadd.f32 %v1369, %v1492
    %1501 = vst.msk [vmem:[%s12] sm:$0xff] %vm1372, %v1493
    %1502 = vst.msk [vmem:[%s12 + $0x8] sm:$0xff] %vm1372, %v1494
    %1503 = vst.msk [vmem:[%s12 + $0x10] sm:$0xff] %vm1372, %v1495
    %1504 = vst.msk [vmem:[%s12 + $0x18] sm:$0xff] %vm1372, %v1496
    %1505 = vst.msk [vmem:[%s12 + $0x20] sm:$0xff] %vm1372, %v1497
    %1506 = vst.msk [vmem:[%s12 + $0x28] sm:$0xff] %vm1372, %v1498
    %1507 = vst.msk [vmem:[%s12 + $0x30] sm:$0xff] %vm1372, %v1499
    %1508 = vst.msk [vmem:[%s12 + $0x38] sm:$0xff] %vm1372, %v1500
    // Predicated region
    $region62: #{tpu_custom_call.1} parent=1 // pred_check
      _
    $region63: #{tpu_custom_call.1} parent=1 // pred_check_branch
      %1510 = sbr.rel (0) target = $region65
    $region64: #{tpu_custom_call.1} parent=1 // pred_region
      %s1512 = ssub.s32 1024, 1024
      %1513 = vsyncadd [#allocation4], %s1512
      %s1514 = sshll.u32 [#allocation10], 4
      %s1515 = int_to_ptr.vmem [resolvable:$true] %s1514
      %1520 = dma.vmem_to_hbm [thread:$0]  %s1515, 1024, %s11, [#allocation4], 128, 128, 8
    $region65: #{tpu_custom_call.1} parent=1 // pred_fallthru
      _
    // Predicated region
    $region66: #{tpu_custom_call.1} parent=1 // pred_check
      _
    $region67: #{tpu_custom_call.1} parent=1 // pred_check_branch
      %1522 = sbr.rel (0) target = $region69
    $region68: #{tpu_custom_call.1} parent=1 // pred_region
      _
    $region69: #{tpu_custom_call.1} parent=1 // pred_fallthru
      _
    // Predicated region
    $region70: #{tpu_custom_call.1} parent=1 // pred_check
      _
    $region71: #{tpu_custom_call.1} parent=1 // pred_check_branch
      %1524 = sbr.rel (0) target = $region73
    $region72: #{tpu_custom_call.1} parent=1 // pred_region
      _
    $region73: #{tpu_custom_call.1} parent=1 // pred_fallthru
      _
    // Predicated region
    $region74: #{tpu_custom_call.1} parent=1 // pred_check
      _
    $region75: #{tpu_custom_call.1} parent=1 // pred_check_branch
      %1526 = sbr.rel (0) target = $region77
    $region76: #{tpu_custom_call.1} parent=1 // pred_region
      _
    $region77: #{tpu_custom_call.1} parent=1 // pred_fallthru
      _
    // Predicated region
    $region78: #{tpu_custom_call.1} parent=1 // pred_check
      _
    $region79: #{tpu_custom_call.1} parent=1 // pred_check_branch
      %1528 = sbr.rel (0) target = $region81
    $region80: #{tpu_custom_call.1} parent=1 // pred_region
      %1529 = dma.done [#allocation4], 1024
    $region81: #{tpu_custom_call.1} parent=1 // pred_fallthru
      _
    // Predicated region
    $region82: #{tpu_custom_call.1} parent=1 // pred_check
      _
    $region83: #{tpu_custom_call.1} parent=1 // pred_check_branch
      %1531 = sbr.rel (0) target = $region85
    $region84: #{tpu_custom_call.1} parent=1 // pred_region
      _
    $region85: #{tpu_custom_call.1} parent=1 // pred_fallthru
      _
    // Predicated region
    $region86: #{tpu_custom_call.1} parent=1 // pred_check
      _
    $region87: #{tpu_custom_call.1} parent=1 // pred_check_branch
      %1533 = sbr.rel (0) target = $region89
    $region88: #{tpu_custom_call.1} parent=1 // pred_region
      _
    $region89: #{tpu_custom_call.1} parent=1 // pred_fallthru
      _
    // Predicated region
    $region90: #{tpu_custom_call.1} parent=1 // pred_check
      _
    $region91: #{tpu_custom_call.1} parent=1 // pred_check_branch
      %1535 = sbr.rel (0) target = $region93
    $region92: #{tpu_custom_call.1} parent=1 // pred_region
      _
    $region93: #{tpu_custom_call.1} parent=1 // pred_fallthru
      _
    %1536 = vsyncpa [#allocation3], 1
    %1537 = vsyncpa [#allocation6], 1
    %1538 = vsyncpa [#allocation9], 1
    %1539 = vsyncpa [#allocation4], 1

</llo_original>
